<compile_context>
chip_gen: v7x
topology: tpu7x:2x2x1
jax: 0.10.0
libtpu: 0.0.40
codegen_flags: <defaults>
</compile_context>

<pallas_src>
import functools

import jax
import jax.numpy as jnp
from jax.experimental import pallas as pl
from jax.experimental.pallas import tpu as pltpu

_BN_EPS = 1e-5       # nn.BatchNorm2d default eps
_NEG_SLOPE = 0.01    # nn.LeakyReLU default negative_slope


def _interp_matrix(out_size: int, in_size: int, dtype=jnp.float32):
    """(out_size, in_size) 1-D linear-interpolation matrix, align_corners=True."""
    if out_size == 1 or in_size == 1:
        src = jnp.zeros((out_size,), dtype)
    else:
        src = jnp.arange(out_size, dtype=dtype) * ((in_size - 1) / (out_size - 1))
    grid = jnp.arange(in_size, dtype=dtype)
    return jnp.maximum(0.0, 1.0 - jnp.abs(src[:, None] - grid[None, :]))


def _upsample_pad_matrix(hin, win, h_out, w_out, dtype=jnp.float32):
    """(hin*win, h_out*w_out) linear operator: flattened input image ->
    2x bilinear upsample (align_corners=True), zero-embedded (F.pad) into the
    (h_out, w_out) canvas, flattened.  Shape-dependent constant (data-independent)."""
    hup, wup = 2 * hin, 2 * win
    rh = _interp_matrix(hup, hin, dtype)                  # (hup, hin)
    rw = _interp_matrix(wup, win, dtype)                  # (wup, win)
    m = jnp.einsum("oh,pw->ophw", rh, rw)                 # (hup, wup, hin, win)
    dy, dx = h_out - hup, w_out - wup
    m = jnp.pad(m, ((dy // 2, dy - dy // 2), (dx // 2, dx - dx // 2), (0, 0), (0, 0)))
    return m.reshape(h_out * w_out, hin * win).T          # (hin*win, h_out*w_out)


def _aligned_halo(w: int) -> int:
    """Zero halo / inter-batch gap (>= one row + one col), lane-aligned (x128)."""
    return ((w + 1 + 127) // 128) * 128


def _up_kernel(x1_ref, x2_ref, up_ref, w1_ref, b1_ref, w2_ref, b2_ref, o_ref,
               pad1_ref, pad2_ref, *, H, W, bpb, halo):
    bf16 = jnp.bfloat16
    HW = H * W
    SEG = HW + halo               # per-batch lane segment: image (HW) + zero gap (halo)
    L = bpb * SEG                 # lane extent covered by the im2col taps / conv matmuls
    cin = pad1_ref.shape[0]
    mid = pad2_ref.shape[0]

    # ---- halo strips read by the 3x3 taps but never written by compute.  Rewritten
    #      every step (cheap) instead of a pl.when(step==0) init: the grid axis is
    #      "parallel", so a TensorCore need not run step 0 on its private scratch. ----
    pad1_ref[:, :halo] = jnp.zeros((cin, halo), bf16)
    pad1_ref[:, halo + L:] = jnp.zeros((cin, halo), bf16)
    pad2_ref[:, :halo] = jnp.zeros((mid, halo), bf16)
    pad2_ref[:, halo + L:] = jnp.zeros((mid, halo), bf16)

    # ---- per batch: 2x bilinear upsample (align_corners=True) + F.pad as ONE bf16
    #      MXU matmul against the precomputed operator, then torch.cat([x2, x1], dim=1)
    #      written straight into conv1's haloed, lane-stacked im2col scratch.  Each
    #      batch's image is followed by a zero gap (>= one row) so the vertical taps
    #      never read across a batch boundary. ----
    for b in range(bpb):
        x1_up = jnp.dot(x1_ref[b], up_ref[...],
                        preferred_element_type=jnp.float32)        # (C1, HW) f32 acc
        base = halo + b * SEG
        pad1_ref[:, base:base + HW] = jnp.concatenate(
            [x2_ref[b], x1_up.astype(bf16)], axis=0)               # (cin, HW) bf16
        pad1_ref[:, base + HW:base + SEG] = jnp.zeros((cin, halo), bf16)

    # ---- column-validity masks for the horizontal taps (shared by both convs) ----
    col = jax.lax.broadcasted_iota(jnp.int32, (1, L), 1) % W
    ok_l = col >= 1              # (w - 1) stays inside the row
    ok_r = col < (W - 1)         # (w + 1) stays inside the row

    def conv_bn_lrelu(pad_ref, w_ref, b_ref):
        # 3x3 same-padding conv as ONE im2col matmul: the 9 spatial taps are static
        # lane-offset slices of the zero-haloed flat bf16 scratch (vertical
        # out-of-bounds reads hit the zero halo / gaps; horizontal wrap is masked).
        taps = []
        for dh in (-1, 0, 1):
            for dw in (-1, 0, 1):
                s = halo + dh * W + dw
                t = pad_ref[:, s:s + L]
                if dw == -1:
                    t = jnp.where(ok_l, t, 0.0)
                elif dw == 1:
                    t = jnp.where(ok_r, t, 0.0)
                taps.append(t)
        patches = jnp.concatenate(taps, axis=0)          # (9*Cin, L) bf16, no recast
        y = jnp.dot(w_ref[...], patches, preferred_element_type=jnp.float32)
        y = y + b_ref[...]                               # folded-BN bias (Cout,1) f32
        return jnp.where(y > 0.0, y, _NEG_SLOPE * y)     # LeakyReLU on the VPU (f32)

    h = conv_bn_lrelu(pad1_ref, w1_ref, b1_ref)          # (mid, L) f32

    for b in range(bpb):
        base = halo + b * SEG
        pad2_ref[:, base:base + HW] = h[:, b * SEG:b * SEG + HW].astype(bf16)
        pad2_ref[:, base + HW:base + SEG] = jnp.zeros((mid, halo), bf16)

    h2 = conv_bn_lrelu(pad2_ref, w2_ref, b2_ref)         # (cout, L) f32

    for b in range(bpb):
        o_ref[b] = h2[:, b * SEG:b * SEG + HW].astype(o_ref.dtype)


def up_forward(x1, x2, w1, bn1, w2, bn2):
    """Forward of `Up` (bilinear=True): upsample x1, pad to x2, concat, DoubleConv.

    x1: (B, C1, Hin, Win)  low-res features (2x bilinear upsample, align_corners=True)
    x2: (B, C2, H, W)      skip connection
    w1: (mid, C1+C2, 3, 3) conv1 weight (no bias); bn1 = (gamma, beta, mean, var), (mid,)
    w2: (cout, mid, 3, 3)  conv2 weight (no bias); bn2 = (gamma, beta, mean, var), (cout,)
    """
    B, C1, Hin, Win = x1.shape
    Bx, C2, H, W = x2.shape
    assert B == Bx and H >= 2 * Hin and W >= 2 * Win
    mid, cin = w1.shape[0], w1.shape[1]
    cout = w2.shape[0]
    assert cin == C1 + C2 and w2.shape[1] == mid
    HW, HWin = H * W, Hin * Win
    halo = _aligned_halo(W)           # lane-aligned halo == inter-batch zero gap
    SEG = HW + halo
    bf16 = jnp.bfloat16
    out_dtype = x2.dtype
    out_isz = jnp.dtype(out_dtype).itemsize

    # ---- batches per grid step: fold batches to amortize per-step overhead, keep the
    #      grid >= 2 steps when possible (both v7x TensorCores), and cap the lane
    #      extent so the bf16 im2col patches stay comfortably inside VMEM. ----
    max_lanes = max(SEG, (4 * 2 ** 20) // (2 * 9 * max(cin, mid)))
    target_bpb = B // 2 if (B % 2 == 0 and B >= 2) else 1
    bpb = max(1, min(target_bpb, max_lanes // SEG))
    while B % bpb:
        bpb -= 1
    G = B // bpb
    L = bpb * SEG

    def fold(w, bn):
        gamma, beta, mean, var = (p.astype(jnp.float32) for p in bn)
        scale = gamma / jnp.sqrt(var + _BN_EPS)
        w_mat = jnp.transpose(w.astype(jnp.float32) * scale[:, None, None, None],
                              (0, 2, 3, 1))
        w_mat = w_mat.reshape(w.shape[0], 9 * w.shape[1]).astype(bf16)
        bias = (beta - mean * scale)[:, None]             # (Cout, 1) f32
        return w_mat, bias

    w1_mat, b1 = fold(w1, bn1)
    w2_mat, b2 = fold(w2, bn2)
    up_mat = _upsample_pad_matrix(Hin, Win, H, W).astype(bf16)   # (HWin, HW) bf16

    x1_flat = x1.reshape(B, C1, HWin).astype(bf16)        # contiguous reshape + cast
    x2_flat = x2.reshape(B, C2, HW).astype(bf16)

    # ---- advisory cost estimate + explicit VMEM budget ----
    flops = 2 * B * C1 * HWin * HW + 2 * G * (mid * 9 * cin + cout * 9 * mid) * L
    bytes_accessed = (2 * (B * C1 * HWin + B * C2 * HW + HWin * HW
                           + mid * 9 * cin + cout * 9 * mid)
                      + 4 * (mid + cout) + out_isz * B * cout * HW)
    cost = pl.CostEstimate(flops=int(flops), transcendentals=0,
                           bytes_accessed=int(bytes_accessed))

    width = L + 2 * halo
    vmem_est = 2 * (
        2 * bpb * (C1 * HWin + C2 * HW) * 2              # double-buffered bf16 inputs
        + 2 * bpb * cout * HW * out_isz                  # double-buffered output block
        + 2 * (HWin * HW + mid * 9 * cin + cout * 9 * mid) * 2 + (mid + cout) * 4
        + (cin + mid) * width * 2                        # haloed bf16 im2col scratches
        + 9 * max(cin, mid) * L * 2                      # in-flight bf16 patches
        + 2 * max(mid, cout) * L * 4)                    # f32 conv outputs / temps
    vmem_limit = int(min(64 * 2 ** 20, max(8 * 2 ** 20, vmem_est)))

    kernel = functools.partial(_up_kernel, H=H, W=W, bpb=bpb, halo=halo)
    out_flat = pl.pallas_call(
        kernel,
        out_shape=jax.ShapeDtypeStruct((B, cout, HW), out_dtype),
        grid=(G,),
        in_specs=[
            pl.BlockSpec((bpb, C1, HWin), lambda g: (g, 0, 0)),   # x1 (bpb batches/step)
            pl.BlockSpec((bpb, C2, HW), lambda g: (g, 0, 0)),     # x2 (skip connection)
            pl.BlockSpec((HWin, HW), lambda g: (0, 0)),           # upsample+pad operator
            pl.BlockSpec((mid, 9 * cin), lambda g: (0, 0)),       # conv1 folded weights
            pl.BlockSpec((mid, 1), lambda g: (0, 0)),             # conv1 folded bias
            pl.BlockSpec((cout, 9 * mid), lambda g: (0, 0)),      # conv2 folded weights
            pl.BlockSpec((cout, 1), lambda g: (0, 0)),            # conv2 folded bias
        ],
        out_specs=pl.BlockSpec((bpb, cout, HW), lambda g: (g, 0, 0)),
        scratch_shapes=[
            pltpu.VMEM((cin, width), bf16),      # conv1 haloed lane-stacked input
            pltpu.VMEM((mid, width), bf16),      # conv2 haloed lane-stacked input
        ],
        compiler_params=pltpu.CompilerParams(
            dimension_semantics=("parallel",),
            vmem_limit_bytes=vmem_limit),
        cost_estimate=cost,
    )(x1_flat, x2_flat, up_mat, w1_mat, b1, w2_mat, b2)

    return out_flat.reshape(B, cout, H, W)


def _reference(x1, x2, w1, bn1, w2, bn2):
    """Pure-JAX mirror of the module semantics (bf16 conv operands, f32 accumulate)."""
    B, C1, Hin, Win = x1.shape
    H, W = x2.shape[2], x2.shape[3]
    rh = _interp_matrix(2 * Hin, Hin)
    rw = _interp_matrix(2 * Win, Win)
    x1u = jnp.einsum("oh,bchw,pw->bcop", rh, x1, rw)
    dy, dx = H - 2 * Hin, W - 2 * Win
    x1u = jnp.pad(x1u, ((0, 0), (0, 0), (dy // 2, dy - dy // 2), (dx // 2, dx - dx // 2)))
    x = jnp.concatenate([x2, x1u], axis=1)

    def conv_bn_lrelu(x, w, bn):
        gamma, beta, mean, var = bn
        scale = gamma / jnp.sqrt(var + _BN_EPS)
        wf = (w * scale[:, None, None, None]).astype(jnp.bfloat16)
        y = jax.lax.conv_general_dilated(
            x.astype(jnp.bfloat16), wf, (1, 1), "SAME",
            dimension_numbers=("NCHW", "OIHW", "NCHW"),
            preferred_element_type=jnp.float32)
        y = y + (beta - mean * scale)[None, :, None, None]
        return jnp.where(y > 0.0, y, _NEG_SLOPE * y)

    return conv_bn_lrelu(conv_bn_lrelu(x, w1, bn1), w2, bn2)


if __name__ == "__main__":
    B = 4                    # exercises batch folding (2 grid steps x 2 batches/step)
    C1, C2 = 8, 8            # x1 (upsampled) channels, x2 (skip) channels
    Hin = Win = 8            # x1 spatial, upsampled 2x -> 16
    H = W = 16               # x2 spatial
    in_channels = C1 + C2    # 16 (channel concat)
    out_channels = 8
    mid_channels = out_channels   # Up.__init__: DoubleConv(in_channels, out_channels)

    key = jax.random.PRNGKey(0)
    ks = jax.random.split(key, 12)
    x1 = jax.random.normal(ks[0], (B, C1, Hin, Win), jnp.float32)
    x2 = jax.random.normal(ks[1], (B, C2, H, W), jnp.float32)
    w1 = 0.1 * jax.random.normal(ks[2], (mid_channels, in_channels, 3, 3), jnp.float32)
    w2 = 0.1 * jax.random.normal(ks[3], (out_channels, mid_channels, 3, 3), jnp.float32)
    bn1 = (1.0 + 0.1 * jax.random.normal(ks[4], (mid_channels,), jnp.float32),
           0.1 * jax.random.normal(ks[5], (mid_channels,), jnp.float32),
           0.1 * jax.random.normal(ks[6], (mid_channels,), jnp.float32),
           1.0 + 0.1 * jax.random.normal(ks[7], (mid_channels,), jnp.float32) ** 2)
    bn2 = (1.0 + 0.1 * jax.random.normal(ks[8], (out_channels,), jnp.float32),
           0.1 * jax.random.normal(ks[9], (out_channels,), jnp.float32),
           0.1 * jax.random.normal(ks[10], (out_channels,), jnp.float32),
           1.0 + 0.1 * jax.random.normal(ks[11], (out_channels,), jnp.float32) ** 2)

    out = up_forward(x1, x2, w1, bn1, w2, bn2)
    jax.block_until_ready(out)

    ref = _reference(x1, x2, w1, bn1, w2, bn2)
    assert out.shape == (B, out_channels, H, W)
    assert jnp.allclose(out, ref, atol=2e-2, rtol=2e-2), float(jnp.max(jnp.abs(out - ref)))

    print("KERNEL_OK")
</pallas_src>

<mosaic_0001>
module attributes {stable_mosaic.version = 11 : i64} {
  func.func @_up_kernel(%arg0: i32, %arg1: memref<2x8x64xbf16, #tpu.memory_space<vmem>>, %arg2: memref<2x8x256xbf16, #tpu.memory_space<vmem>>, %arg3: memref<64x256xbf16, #tpu.memory_space<vmem>>, %arg4: memref<8x144xbf16, #tpu.memory_space<vmem>>, %arg5: memref<8x1xf32, #tpu.memory_space<vmem>>, %arg6: memref<8x72xbf16, #tpu.memory_space<vmem>>, %arg7: memref<8x1xf32, #tpu.memory_space<vmem>>, %arg8: memref<2x8x256xf32, #tpu.memory_space<vmem>>, %arg9: memref<16x1024xbf16, #tpu.memory_space<vmem>>, %arg10: memref<8x1024xbf16, #tpu.memory_space<vmem>>) attributes {dimension_semantics = [#tpu.dimension_semantics<parallel>], iteration_bounds = array<i64: 2>, scalar_prefetch = 0 : i64, scratch_operands = 2 : i64, tpu.core_type = #tpu.core_type<tc>, window_params = [{transform_indices = @transform_0, window_bounds = array<i64: 2, 8, 64>}, {transform_indices = @transform_1, window_bounds = array<i64: 2, 8, 256>}, {pipeline_mode = #tpu.pipeline_mode<synchronous>, transform_indices = @transform_2, window_bounds = array<i64: 64, 256>}, {pipeline_mode = #tpu.pipeline_mode<synchronous>, transform_indices = @transform_3, window_bounds = array<i64: 8, 144>}, {pipeline_mode = #tpu.pipeline_mode<synchronous>, transform_indices = @transform_4, window_bounds = array<i64: 8, 1>}, {pipeline_mode = #tpu.pipeline_mode<synchronous>, transform_indices = @transform_5, window_bounds = array<i64: 8, 72>}, {pipeline_mode = #tpu.pipeline_mode<synchronous>, transform_indices = @transform_6, window_bounds = array<i64: 8, 1>}, {transform_indices = @transform_7, window_bounds = array<i64: 2, 8, 256>}]} {
    %cst = arith.constant 0.000000e+00 : bf16
    %0 = vector.broadcast %cst : bf16 to vector<16x128xbf16>
    %c0 = arith.constant 0 : index
    %c0_0 = arith.constant 0 : index
    %1 = vector.load %arg9[%c0, %c0_0] : memref<16x1024xbf16, #tpu.memory_space<vmem>>, vector<16x128xbf16>
    tpu.vector_store %arg9[%c0, %c0_0], %0 {strides = array<i32>} : memref<16x1024xbf16, #tpu.memory_space<vmem>>, vector<16x128xbf16>,
    %cst_1 = arith.constant 0.000000e+00 : bf16
    %2 = vector.broadcast %cst_1 : bf16 to vector<16x128xbf16>
    %c0_2 = arith.constant 0 : index
    %c896 = arith.constant 896 : index
    %3 = vector.load %arg9[%c0_2, %c896] : memref<16x1024xbf16, #tpu.memory_space<vmem>>, vector<16x128xbf16>
    tpu.vector_store %arg9[%c0_2, %c896], %2 {strides = array<i32>} : memref<16x1024xbf16, #tpu.memory_space<vmem>>, vector<16x128xbf16>,
    %cst_3 = arith.constant 0.000000e+00 : bf16
    %4 = vector.broadcast %cst_3 : bf16 to vector<8x128xbf16>
    %c0_4 = arith.constant 0 : index
    %c0_5 = arith.constant 0 : index
    %5 = vector.load %arg10[%c0_4, %c0_5] : memref<8x1024xbf16, #tpu.memory_space<vmem>>, vector<8x128xbf16>
    tpu.vector_store %arg10[%c0_4, %c0_5], %4 {strides = array<i32>} : memref<8x1024xbf16, #tpu.memory_space<vmem>>, vector<8x128xbf16>,
    %cst_6 = arith.constant 0.000000e+00 : bf16
    %6 = vector.broadcast %cst_6 : bf16 to vector<8x128xbf16>
    %c0_7 = arith.constant 0 : index
    %c896_8 = arith.constant 896 : index
    %7 = vector.load %arg10[%c0_7, %c896_8] : memref<8x1024xbf16, #tpu.memory_space<vmem>>, vector<8x128xbf16>
    tpu.vector_store %arg10[%c0_7, %c896_8], %6 {strides = array<i32>} : memref<8x1024xbf16, #tpu.memory_space<vmem>>, vector<8x128xbf16>,
    %c0_9 = arith.constant 0 : index
    %c0_10 = arith.constant 0 : index
    %c0_11 = arith.constant 0 : index
    %8 = vector.load %arg1[%c0_9, %c0_10, %c0_11] : memref<2x8x64xbf16, #tpu.memory_space<vmem>>, vector<1x8x64xbf16>
    %9 = vector.shape_cast %8 : vector<1x8x64xbf16> to vector<8x64xbf16>
    %c0_12 = arith.constant 0 : index
    %c0_13 = arith.constant 0 : index
    %10 = vector.load %arg3[%c0_12, %c0_13] : memref<64x256xbf16, #tpu.memory_space<vmem>>, vector<64x256xbf16>
    %cst_14 = arith.constant dense<0.000000e+00> : vector<8x256xf32>
    %11 = tpu.matmul %9, %10, %cst_14 {dimension_numbers = #tpu.dot_dimension_numbers<[1], [0], [0], [1], [0, 0, 1, 1], [], []>} : vector<8x64xbf16>, vector<64x256xbf16>, vector<8x256xf32> -> vector<8x256xf32>
    %c0_15 = arith.constant 0 : index
    %c0_16 = arith.constant 0 : index
    %c0_17 = arith.constant 0 : index
    %12 = vector.load %arg2[%c0_15, %c0_16, %c0_17] : memref<2x8x256xbf16, #tpu.memory_space<vmem>>, vector<1x8x256xbf16>
    %13 = vector.shape_cast %12 : vector<1x8x256xbf16> to vector<8x256xbf16>
    %14 = arith.truncf %11 : vector<8x256xf32> to vector<8x256xbf16>
    %15 = tpu.concatenate %13, %14 in 0 : vector<8x256xbf16>, vector<8x256xbf16> -> vector<16x256xbf16>
    %c0_18 = arith.constant 0 : index
    %c128 = arith.constant 128 : index
    %16 = vector.load %arg9[%c0_18, %c128] : memref<16x1024xbf16, #tpu.memory_space<vmem>>, vector<16x256xbf16>
    tpu.vector_store %arg9[%c0_18, %c128], %15 {strides = array<i32>} : memref<16x1024xbf16, #tpu.memory_space<vmem>>, vector<16x256xbf16>,
    %cst_19 = arith.constant 0.000000e+00 : bf16
    %17 = vector.broadcast %cst_19 : bf16 to vector<16x128xbf16>
    %c0_20 = arith.constant 0 : index
    %c384 = arith.constant 384 : index
    %18 = vector.load %arg9[%c0_20, %c384] : memref<16x1024xbf16, #tpu.memory_space<vmem>>, vector<16x128xbf16>
    tpu.vector_store %arg9[%c0_20, %c384], %17 {strides = array<i32>} : memref<16x1024xbf16, #tpu.memory_space<vmem>>, vector<16x128xbf16>,
    %c1 = arith.constant 1 : index
    %c0_21 = arith.constant 0 : index
    %c0_22 = arith.constant 0 : index
    %19 = vector.load %arg1[%c1, %c0_21, %c0_22] : memref<2x8x64xbf16, #tpu.memory_space<vmem>>, vector<1x8x64xbf16>
    %20 = vector.shape_cast %19 : vector<1x8x64xbf16> to vector<8x64xbf16>
    %c0_23 = arith.constant 0 : index
    %c0_24 = arith.constant 0 : index
    %21 = vector.load %arg3[%c0_23, %c0_24] : memref<64x256xbf16, #tpu.memory_space<vmem>>, vector<64x256xbf16>
    %cst_25 = arith.constant dense<0.000000e+00> : vector<8x256xf32>
    %22 = tpu.matmul %20, %21, %cst_25 {dimension_numbers = #tpu.dot_dimension_numbers<[1], [0], [0], [1], [0, 0, 1, 1], [], []>} : vector<8x64xbf16>, vector<64x256xbf16>, vector<8x256xf32> -> vector<8x256xf32>
    %c1_26 = arith.constant 1 : index
    %c0_27 = arith.constant 0 : index
    %c0_28 = arith.constant 0 : index
    %23 = vector.load %arg2[%c1_26, %c0_27, %c0_28] : memref<2x8x256xbf16, #tpu.memory_space<vmem>>, vector<1x8x256xbf16>
    %24 = vector.shape_cast %23 : vector<1x8x256xbf16> to vector<8x256xbf16>
    %25 = arith.truncf %22 : vector<8x256xf32> to vector<8x256xbf16>
    %26 = tpu.concatenate %24, %25 in 0 : vector<8x256xbf16>, vector<8x256xbf16> -> vector<16x256xbf16>
    %c0_29 = arith.constant 0 : index
    %c512 = arith.constant 512 : index
    %27 = vector.load %arg9[%c0_29, %c512] : memref<16x1024xbf16, #tpu.memory_space<vmem>>, vector<16x256xbf16>
    tpu.vector_store %arg9[%c0_29, %c512], %26 {strides = array<i32>} : memref<16x1024xbf16, #tpu.memory_space<vmem>>, vector<16x256xbf16>,
    %cst_30 = arith.constant 0.000000e+00 : bf16
    %28 = vector.broadcast %cst_30 : bf16 to vector<16x128xbf16>
    %c0_31 = arith.constant 0 : index
    %c768 = arith.constant 768 : index
    %29 = vector.load %arg9[%c0_31, %c768] : memref<16x1024xbf16, #tpu.memory_space<vmem>>, vector<16x128xbf16>
    tpu.vector_store %arg9[%c0_31, %c768], %28 {strides = array<i32>} : memref<16x1024xbf16, #tpu.memory_space<vmem>>, vector<16x128xbf16>,
    %30 = tpu.iota {dimensions = array<i32: 1>} : vector<1x768xi32>
    %c16_i32 = arith.constant 16 : i32
    %c0_i32 = arith.constant 0 : i32
    %31 = arith.cmpi eq, %c16_i32, %c0_i32 : i32
    %c1_i32 = arith.constant 1 : i32
    %32 = arith.select %31, %c1_i32, %c16_i32 : i32
    %33 = vector.broadcast %32 : i32 to vector<1x768xi32>
    %34 = arith.remsi %30, %33 : vector<1x768xi32>
    %c0_i32_32 = arith.constant 0 : i32
    %35 = vector.broadcast %c0_i32_32 : i32 to vector<1x768xi32>
    %36 = arith.cmpi ne, %34, %35 : vector<1x768xi32>
    %c0_i32_33 = arith.constant 0 : i32
    %37 = vector.broadcast %c0_i32_33 : i32 to vector<1x768xi32>
    %38 = arith.cmpi slt, %34, %37 : vector<1x768xi32>
    %c0_i32_34 = arith.constant 0 : i32
    %39 = arith.cmpi slt, %32, %c0_i32_34 : i32
    %40 = vector.broadcast %39 : i1 to vector<1x768xi1>
    %41 = vector.broadcast %40 : vector<1x768xi1> to vector<1x768xi1>
    %42 = arith.xori %38, %41 : vector<1x768xi1>
    %43 = arith.andi %42, %36 : vector<1x768xi1>
    %44 = vector.broadcast %32 : i32 to vector<1x768xi32>
    %45 = arith.addi %34, %44 : vector<1x768xi32>
    %46 = arith.select %43, %45, %34 : vector<1x768xi1>, vector<1x768xi32>
    %c1_i32_35 = arith.constant 1 : i32
    %47 = vector.broadcast %c1_i32_35 : i32 to vector<1x768xi32>
    %48 = arith.cmpi sge, %46, %47 : vector<1x768xi32>
    %c15_i32 = arith.constant 15 : i32
    %49 = vector.broadcast %c15_i32 : i32 to vector<1x768xi32>
    %50 = arith.cmpi slt, %46, %49 : vector<1x768xi32>
    %c0_36 = arith.constant 0 : index
    %c111 = arith.constant 111 : index
    %51 = vector.load %arg9[%c0_36, %c111] : memref<16x1024xbf16, #tpu.memory_space<vmem>>, vector<16x768xbf16>
    %cst_37 = arith.constant 0.000000e+00 : f32
    %52 = arith.truncf %cst_37 : f32 to bf16
    %53 = vector.shape_cast %48 : vector<1x768xi1> to vector<1x768xi1>
    %54 = vector.broadcast %53 : vector<1x768xi1> to vector<16x768xi1>
    %55 = vector.broadcast %52 : bf16 to vector<16x768xbf16>
    %56 = arith.select %54, %51, %55 : vector<16x768xi1>, vector<16x768xbf16>
    %c0_38 = arith.constant 0 : index
    %c112 = arith.constant 112 : index
    %57 = vector.load %arg9[%c0_38, %c112] : memref<16x1024xbf16, #tpu.memory_space<vmem>>, vector<16x768xbf16>
    %c0_39 = arith.constant 0 : index
    %c113 = arith.constant 113 : index
    %58 = vector.load %arg9[%c0_39, %c113] : memref<16x1024xbf16, #tpu.memory_space<vmem>>, vector<16x768xbf16>
    %cst_40 = arith.constant 0.000000e+00 : f32
    %59 = arith.truncf %cst_40 : f32 to bf16
    %60 = vector.shape_cast %50 : vector<1x768xi1> to vector<1x768xi1>
    %61 = vector.broadcast %60 : vector<1x768xi1> to vector<16x768xi1>
    %62 = vector.broadcast %59 : bf16 to vector<16x768xbf16>
    %63 = arith.select %61, %58, %62 : vector<16x768xi1>, vector<16x768xbf16>
    %c0_41 = arith.constant 0 : index
    %c127 = arith.constant 127 : index
    %64 = vector.load %arg9[%c0_41, %c127] : memref<16x1024xbf16, #tpu.memory_space<vmem>>, vector<16x768xbf16>
    %cst_42 = arith.constant 0.000000e+00 : f32
    %65 = arith.truncf %cst_42 : f32 to bf16
    %66 = vector.shape_cast %48 : vector<1x768xi1> to vector<1x768xi1>
    %67 = vector.broadcast %66 : vector<1x768xi1> to vector<16x768xi1>
    %68 = vector.broadcast %65 : bf16 to vector<16x768xbf16>
    %69 = arith.select %67, %64, %68 : vector<16x768xi1>, vector<16x768xbf16>
    %c0_43 = arith.constant 0 : index
    %c128_44 = arith.constant 128 : index
    %70 = vector.load %arg9[%c0_43, %c128_44] : memref<16x1024xbf16, #tpu.memory_space<vmem>>, vector<16x768xbf16>
    %c0_45 = arith.constant 0 : index
    %c129 = arith.constant 129 : index
    %71 = vector.load %arg9[%c0_45, %c129] : memref<16x1024xbf16, #tpu.memory_space<vmem>>, vector<16x768xbf16>
    %cst_46 = arith.constant 0.000000e+00 : f32
    %72 = arith.truncf %cst_46 : f32 to bf16
    %73 = vector.shape_cast %50 : vector<1x768xi1> to vector<1x768xi1>
    %74 = vector.broadcast %73 : vector<1x768xi1> to vector<16x768xi1>
    %75 = vector.broadcast %72 : bf16 to vector<16x768xbf16>
    %76 = arith.select %74, %71, %75 : vector<16x768xi1>, vector<16x768xbf16>
    %c0_47 = arith.constant 0 : index
    %c143 = arith.constant 143 : index
    %77 = vector.load %arg9[%c0_47, %c143] : memref<16x1024xbf16, #tpu.memory_space<vmem>>, vector<16x768xbf16>
    %cst_48 = arith.constant 0.000000e+00 : f32
    %78 = arith.truncf %cst_48 : f32 to bf16
    %79 = vector.shape_cast %48 : vector<1x768xi1> to vector<1x768xi1>
    %80 = vector.broadcast %79 : vector<1x768xi1> to vector<16x768xi1>
    %81 = vector.broadcast %78 : bf16 to vector<16x768xbf16>
    %82 = arith.select %80, %77, %81 : vector<16x768xi1>, vector<16x768xbf16>
    %c0_49 = arith.constant 0 : index
    %c144 = arith.constant 144 : index
    %83 = vector.load %arg9[%c0_49, %c144] : memref<16x1024xbf16, #tpu.memory_space<vmem>>, vector<16x768xbf16>
    %c0_50 = arith.constant 0 : index
    %c145 = arith.constant 145 : index
    %84 = vector.load %arg9[%c0_50, %c145] : memref<16x1024xbf16, #tpu.memory_space<vmem>>, vector<16x768xbf16>
    %cst_51 = arith.constant 0.000000e+00 : f32
    %85 = arith.truncf %cst_51 : f32 to bf16
    %86 = vector.shape_cast %50 : vector<1x768xi1> to vector<1x768xi1>
    %87 = vector.broadcast %86 : vector<1x768xi1> to vector<16x768xi1>
    %88 = vector.broadcast %85 : bf16 to vector<16x768xbf16>
    %89 = arith.select %87, %84, %88 : vector<16x768xi1>, vector<16x768xbf16>
    %90 = tpu.concatenate %56, %57, %63, %69, %70, %76, %82, %83, %89 in 0 : vector<16x768xbf16>, vector<16x768xbf16>, vector<16x768xbf16>, vector<16x768xbf16>, vector<16x768xbf16>, vector<16x768xbf16>, vector<16x768xbf16>, vector<16x768xbf16>, vector<16x768xbf16> -> vector<144x768xbf16>
    %c0_52 = arith.constant 0 : index
    %c0_53 = arith.constant 0 : index
    %91 = vector.load %arg4[%c0_52, %c0_53] : memref<8x144xbf16, #tpu.memory_space<vmem>>, vector<8x144xbf16>
    %cst_54 = arith.constant dense<0.000000e+00> : vector<8x768xf32>
    %92 = tpu.matmul %91, %90, %cst_54 {dimension_numbers = #tpu.dot_dimension_numbers<[1], [0], [0], [1], [0, 0, 1, 1], [], []>} : vector<8x144xbf16>, vector<144x768xbf16>, vector<8x768xf32> -> vector<8x768xf32>
    %c0_55 = arith.constant 0 : index
    %c0_56 = arith.constant 0 : index
    %93 = vector.load %arg5[%c0_55, %c0_56] : memref<8x1xf32, #tpu.memory_space<vmem>>, vector<8x1xf32>
    %94 = vector.broadcast %93 : vector<8x1xf32> to vector<8x768xf32>
    %95 = arith.addf %92, %94 : vector<8x768xf32>
    %cst_57 = arith.constant 0.000000e+00 : f32
    %96 = vector.broadcast %cst_57 : f32 to vector<8x768xf32>
    %97 = arith.cmpf ogt, %95, %96 : vector<8x768xf32>
    %cst_58 = arith.constant 0.00999999977 : f32
    %98 = vector.broadcast %cst_58 : f32 to vector<8x768xf32>
    %99 = arith.mulf %98, %95 : vector<8x768xf32>
    %100 = arith.select %97, %95, %99 : vector<8x768xi1>, vector<8x768xf32>
    %101 = vector.extract_strided_slice %100 {offsets = [0, 0], sizes = [8, 256], strides = [1, 1]} : vector<8x768xf32> to vector<8x256xf32>
    %102 = arith.truncf %101 : vector<8x256xf32> to vector<8x256xbf16>
    %c0_59 = arith.constant 0 : index
    %c128_60 = arith.constant 128 : index
    %103 = vector.load %arg10[%c0_59, %c128_60] : memref<8x1024xbf16, #tpu.memory_space<vmem>>, vector<8x256xbf16>
    tpu.vector_store %arg10[%c0_59, %c128_60], %102 {strides = array<i32>} : memref<8x1024xbf16, #tpu.memory_space<vmem>>, vector<8x256xbf16>,
    %cst_61 = arith.constant 0.000000e+00 : bf16
    %104 = vector.broadcast %cst_61 : bf16 to vector<8x128xbf16>
    %c0_62 = arith.constant 0 : index
    %c384_63 = arith.constant 384 : index
    %105 = vector.load %arg10[%c0_62, %c384_63] : memref<8x1024xbf16, #tpu.memory_space<vmem>>, vector<8x128xbf16>
    tpu.vector_store %arg10[%c0_62, %c384_63], %104 {strides = array<i32>} : memref<8x1024xbf16, #tpu.memory_space<vmem>>, vector<8x128xbf16>,
    %106 = vector.extract_strided_slice %100 {offsets = [0, 384], sizes = [8, 256], strides = [1, 1]} : vector<8x768xf32> to vector<8x256xf32>
    %107 = arith.truncf %106 : vector<8x256xf32> to vector<8x256xbf16>
    %c0_64 = arith.constant 0 : index
    %c512_65 = arith.constant 512 : index
    %108 = vector.load %arg10[%c0_64, %c512_65] : memref<8x1024xbf16, #tpu.memory_space<vmem>>, vector<8x256xbf16>
    tpu.vector_store %arg10[%c0_64, %c512_65], %107 {strides = array<i32>} : memref<8x1024xbf16, #tpu.memory_space<vmem>>, vector<8x256xbf16>,
    %cst_66 = arith.constant 0.000000e+00 : bf16
    %109 = vector.broadcast %cst_66 : bf16 to vector<8x128xbf16>
    %c0_67 = arith.constant 0 : index
    %c768_68 = arith.constant 768 : index
    %110 = vector.load %arg10[%c0_67, %c768_68] : memref<8x1024xbf16, #tpu.memory_space<vmem>>, vector<8x128xbf16>
    tpu.vector_store %arg10[%c0_67, %c768_68], %109 {strides = array<i32>} : memref<8x1024xbf16, #tpu.memory_space<vmem>>, vector<8x128xbf16>,
    %c0_69 = arith.constant 0 : index
    %c111_70 = arith.constant 111 : index
    %111 = vector.load %arg10[%c0_69, %c111_70] : memref<8x1024xbf16, #tpu.memory_space<vmem>>, vector<8x768xbf16>
    %cst_71 = arith.constant 0.000000e+00 : f32
    %112 = arith.truncf %cst_71 : f32 to bf16
    %113 = vector.shape_cast %48 : vector<1x768xi1> to vector<1x768xi1>
    %114 = vector.broadcast %113 : vector<1x768xi1> to vector<8x768xi1>
    %115 = vector.broadcast %112 : bf16 to vector<8x768xbf16>
    %116 = arith.select %114, %111, %115 : vector<8x768xi1>, vector<8x768xbf16>
    %c0_72 = arith.constant 0 : index
    %c112_73 = arith.constant 112 : index
    %117 = vector.load %arg10[%c0_72, %c112_73] : memref<8x1024xbf16, #tpu.memory_space<vmem>>, vector<8x768xbf16>
    %c0_74 = arith.constant 0 : index
    %c113_75 = arith.constant 113 : index
    %118 = vector.load %arg10[%c0_74, %c113_75] : memref<8x1024xbf16, #tpu.memory_space<vmem>>, vector<8x768xbf16>
    %cst_76 = arith.constant 0.000000e+00 : f32
    %119 = arith.truncf %cst_76 : f32 to bf16
    %120 = vector.shape_cast %50 : vector<1x768xi1> to vector<1x768xi1>
    %121 = vector.broadcast %120 : vector<1x768xi1> to vector<8x768xi1>
    %122 = vector.broadcast %119 : bf16 to vector<8x768xbf16>
    %123 = arith.select %121, %118, %122 : vector<8x768xi1>, vector<8x768xbf16>
    %c0_77 = arith.constant 0 : index
    %c127_78 = arith.constant 127 : index
    %124 = vector.load %arg10[%c0_77, %c127_78] : memref<8x1024xbf16, #tpu.memory_space<vmem>>, vector<8x768xbf16>
    %cst_79 = arith.constant 0.000000e+00 : f32
    %125 = arith.truncf %cst_79 : f32 to bf16
    %126 = vector.shape_cast %48 : vector<1x768xi1> to vector<1x768xi1>
    %127 = vector.broadcast %126 : vector<1x768xi1> to vector<8x768xi1>
    %128 = vector.broadcast %125 : bf16 to vector<8x768xbf16>
    %129 = arith.select %127, %124, %128 : vector<8x768xi1>, vector<8x768xbf16>
    %c0_80 = arith.constant 0 : index
    %c128_81 = arith.constant 128 : index
    %130 = vector.load %arg10[%c0_80, %c128_81] : memref<8x1024xbf16, #tpu.memory_space<vmem>>, vector<8x768xbf16>
    %c0_82 = arith.constant 0 : index
    %c129_83 = arith.constant 129 : index
    %131 = vector.load %arg10[%c0_82, %c129_83] : memref<8x1024xbf16, #tpu.memory_space<vmem>>, vector<8x768xbf16>
    %cst_84 = arith.constant 0.000000e+00 : f32
    %132 = arith.truncf %cst_84 : f32 to bf16
    %133 = vector.shape_cast %50 : vector<1x768xi1> to vector<1x768xi1>
    %134 = vector.broadcast %133 : vector<1x768xi1> to vector<8x768xi1>
    %135 = vector.broadcast %132 : bf16 to vector<8x768xbf16>
    %136 = arith.select %134, %131, %135 : vector<8x768xi1>, vector<8x768xbf16>
    %c0_85 = arith.constant 0 : index
    %c143_86 = arith.constant 143 : index
    %137 = vector.load %arg10[%c0_85, %c143_86] : memref<8x1024xbf16, #tpu.memory_space<vmem>>, vector<8x768xbf16>
    %cst_87 = arith.constant 0.000000e+00 : f32
    %138 = arith.truncf %cst_87 : f32 to bf16
    %139 = vector.shape_cast %48 : vector<1x768xi1> to vector<1x768xi1>
    %140 = vector.broadcast %139 : vector<1x768xi1> to vector<8x768xi1>
    %141 = vector.broadcast %138 : bf16 to vector<8x768xbf16>
    %142 = arith.select %140, %137, %141 : vector<8x768xi1>, vector<8x768xbf16>
    %c0_88 = arith.constant 0 : index
    %c144_89 = arith.constant 144 : index
    %143 = vector.load %arg10[%c0_88, %c144_89] : memref<8x1024xbf16, #tpu.memory_space<vmem>>, vector<8x768xbf16>
    %c0_90 = arith.constant 0 : index
    %c145_91 = arith.constant 145 : index
    %144 = vector.load %arg10[%c0_90, %c145_91] : memref<8x1024xbf16, #tpu.memory_space<vmem>>, vector<8x768xbf16>
    %cst_92 = arith.constant 0.000000e+00 : f32
    %145 = arith.truncf %cst_92 : f32 to bf16
    %146 = vector.shape_cast %50 : vector<1x768xi1> to vector<1x768xi1>
    %147 = vector.broadcast %146 : vector<1x768xi1> to vector<8x768xi1>
    %148 = vector.broadcast %145 : bf16 to vector<8x768xbf16>
    %149 = arith.select %147, %144, %148 : vector<8x768xi1>, vector<8x768xbf16>
    %150 = tpu.concatenate %116, %117, %123, %129, %130, %136, %142, %143, %149 in 0 : vector<8x768xbf16>, vector<8x768xbf16>, vector<8x768xbf16>, vector<8x768xbf16>, vector<8x768xbf16>, vector<8x768xbf16>, vector<8x768xbf16>, vector<8x768xbf16>, vector<8x768xbf16> -> vector<72x768xbf16>
    %c0_93 = arith.constant 0 : index
    %c0_94 = arith.constant 0 : index
    %151 = vector.load %arg6[%c0_93, %c0_94] : memref<8x72xbf16, #tpu.memory_space<vmem>>, vector<8x72xbf16>
    %cst_95 = arith.constant dense<0.000000e+00> : vector<8x768xf32>
    %152 = tpu.matmul %151, %150, %cst_95 {dimension_numbers = #tpu.dot_dimension_numbers<[1], [0], [0], [1], [0, 0, 1, 1], [], []>} : vector<8x72xbf16>, vector<72x768xbf16>, vector<8x768xf32> -> vector<8x768xf32>
    %c0_96 = arith.constant 0 : index
    %c0_97 = arith.constant 0 : index
    %153 = vector.load %arg7[%c0_96, %c0_97] : memref<8x1xf32, #tpu.memory_space<vmem>>, vector<8x1xf32>
    %154 = vector.broadcast %153 : vector<8x1xf32> to vector<8x768xf32>
    %155 = arith.addf %152, %154 : vector<8x768xf32>
    %cst_98 = arith.constant 0.000000e+00 : f32
    %156 = vector.broadcast %cst_98 : f32 to vector<8x768xf32>
    %157 = arith.cmpf ogt, %155, %156 : vector<8x768xf32>
    %cst_99 = arith.constant 0.00999999977 : f32
    %158 = vector.broadcast %cst_99 : f32 to vector<8x768xf32>
    %159 = arith.mulf %158, %155 : vector<8x768xf32>
    %160 = arith.select %157, %155, %159 : vector<8x768xi1>, vector<8x768xf32>
    %161 = vector.extract_strided_slice %160 {offsets = [0, 0], sizes = [8, 256], strides = [1, 1]} : vector<8x768xf32> to vector<8x256xf32>
    %c0_100 = arith.constant 0 : index
    %c0_101 = arith.constant 0 : index
    %c0_102 = arith.constant 0 : index
    %162 = vector.load %arg8[%c0_100, %c0_101, %c0_102] : memref<2x8x256xf32, #tpu.memory_space<vmem>>, vector<1x8x256xf32>
    %163 = vector.shape_cast %162 : vector<1x8x256xf32> to vector<8x256xf32>
    %164 = vector.shape_cast %161 : vector<8x256xf32> to vector<1x8x256xf32>
    tpu.vector_store %arg8[%c0_100, %c0_101, %c0_102], %164 {strides = array<i32>} : memref<2x8x256xf32, #tpu.memory_space<vmem>>, vector<1x8x256xf32>,
    %165 = vector.extract_strided_slice %160 {offsets = [0, 384], sizes = [8, 256], strides = [1, 1]} : vector<8x768xf32> to vector<8x256xf32>
    %c1_103 = arith.constant 1 : index
    %c0_104 = arith.constant 0 : index
    %c0_105 = arith.constant 0 : index
    %166 = vector.load %arg8[%c1_103, %c0_104, %c0_105] : memref<2x8x256xf32, #tpu.memory_space<vmem>>, vector<1x8x256xf32>
    %167 = vector.shape_cast %166 : vector<1x8x256xf32> to vector<8x256xf32>
    %168 = vector.shape_cast %165 : vector<8x256xf32> to vector<1x8x256xf32>
    tpu.vector_store %arg8[%c1_103, %c0_104, %c0_105], %168 {strides = array<i32>} : memref<2x8x256xf32, #tpu.memory_space<vmem>>, vector<1x8x256xf32>,
    return
  }
  func.func @transform_0(%arg0: i32) -> (i32, i32, i32) {
    %c0_i32 = arith.constant 0 : i32
    %c0_i32_0 = arith.constant 0 : i32
    %c0_i32_1 = arith.constant 0 : i32
    return %arg0, %c0_i32, %c0_i32_0 : i32, i32, i32
  }
  func.func @transform_1(%arg0: i32) -> (i32, i32, i32) {
    %c0_i32 = arith.constant 0 : i32
    %c0_i32_0 = arith.constant 0 : i32
    %c0_i32_1 = arith.constant 0 : i32
    return %arg0, %c0_i32, %c0_i32_0 : i32, i32, i32
  }
  func.func @transform_2(%arg0: i32) -> (i32, i32) {
    %c0_i32 = arith.constant 0 : i32
    %c0_i32_0 = arith.constant 0 : i32
    %c0_i32_1 = arith.constant 0 : i32
    return %c0_i32, %c0_i32_0 : i32, i32
  }
  func.func @transform_3(%arg0: i32) -> (i32, i32) {
    %c0_i32 = arith.constant 0 : i32
    %c0_i32_0 = arith.constant 0 : i32
    %c0_i32_1 = arith.constant 0 : i32
    return %c0_i32, %c0_i32_0 : i32, i32
  }
  func.func @transform_4(%arg0: i32) -> (i32, i32) {
    %c0_i32 = arith.constant 0 : i32
    %c0_i32_0 = arith.constant 0 : i32
    %c0_i32_1 = arith.constant 0 : i32
    return %c0_i32, %c0_i32_0 : i32, i32
  }
  func.func @transform_5(%arg0: i32) -> (i32, i32) {
    %c0_i32 = arith.constant 0 : i32
    %c0_i32_0 = arith.constant 0 : i32
    %c0_i32_1 = arith.constant 0 : i32
    return %c0_i32, %c0_i32_0 : i32, i32
  }
  func.func @transform_6(%arg0: i32) -> (i32, i32) {
    %c0_i32 = arith.constant 0 : i32
    %c0_i32_0 = arith.constant 0 : i32
    %c0_i32_1 = arith.constant 0 : i32
    return %c0_i32, %c0_i32_0 : i32, i32
  }
  func.func @transform_7(%arg0: i32) -> (i32, i32, i32) {
    %c0_i32 = arith.constant 0 : i32
    %c0_i32_0 = arith.constant 0 : i32
    %c0_i32_1 = arith.constant 0 : i32
    return %arg0, %c0_i32, %c0_i32_0 : i32, i32, i32
  }
}

</mosaic_0001>

<llo_original>
// kernel: tpu_custom_call.1
$region0: #{tpu_custom_call.1}
  #allocation0 [shape = 'u32[]', space=smem, size = 0x4, offset = 0x4, fixed_abs, tag = 'smem constant byte address 0x4 - core index']
  #allocation1 [shape = 'u32[144,128]{1,0:T(1,128)}', space=vmem, size = 0x12000, scoped, tag = 'internal scratch']
  #allocation2 [shape = 'bf16[16,1024]{1,0:T(16,128)(2,1)}', space=vmem, size = 0x8000, scoped, tag = 'scratch operand']
  #allocation3 [shape = 'bf16[8,1024]{1,0:T(8,128)(2,1)}', space=vmem, size = 0x4000, scoped, tag = 'scratch operand']
  %s0 = inlined_call_operand.vmem [shape: bf16[4,8,64], index: 0, kind: input, shape index: {}]
  %s1 = inlined_call_operand.hbm [shape: bf16[4,8,256], index: 1, kind: input, shape index: {}]
  %s2 = inlined_call_operand.hbm [shape: bf16[64,256], index: 2, kind: input, shape index: {}]
  %s3 = inlined_call_operand.vmem [shape: bf16[8,144], index: 3, kind: input, shape index: {}]
  %s4 = inlined_call_operand.vmem [shape: f32[8,1], index: 4, kind: input, shape index: {}]
  %s5 = inlined_call_operand.vmem [shape: bf16[8,72], index: 5, kind: input, shape index: {}]
  %s6 = inlined_call_operand.vmem [shape: f32[8,1], index: 6, kind: input, shape index: {}]
  %s7 = inlined_call_operand.hbm [shape: f32[4,8,256], index: 7, kind: output, shape index: {}]
  %s8 = sld [smem:[#allocation0]]
  $region69: #{tpu_custom_call.1} parent=0
    _
  %s10 = ssub.s32 1, %s8
  %s11 = scalar_select 0, %s10, %s8
  $region1: #{tpu_custom_call.1} parent=0
    #allocation4 [shape = 'u8[16384]{0}', space=vmem, size = 0x4000, scoped, tag = 'input window, operand 1']
    #allocation5 [shape = 's32[2]{0}', space=sflag, size = 0x8, scoped, tag = 'scoped memory for tpu_custom_call.1']
    #allocation6 [shape = 's32[2]{0}', space=sflag, size = 0x8, scoped, tag = 'scoped memory for tpu_custom_call.1']
    #allocation7 [shape = 'u8[32768]{0}', space=vmem, size = 0x8000, scoped, tag = 'input window, operand 2, single buffered']
    #allocation8 [shape = 's32[1]{0}', space=sflag, size = 0x4, scoped, tag = 'scoped memory for tpu_custom_call.1']
    #allocation9 [shape = 'u8[32768]{0}', space=vmem, size = 0x8000, scoped, tag = 'output window, operand 0']
    %12 = vsyncpa [#allocation5], 0
    %s13 = scalar_lea.sflag [#allocation5], 1
    %14 = vsyncpa %s13, 0
    %15 = vsyncpa [#allocation8], 0
    %16 = vsyncpa [#allocation6], 0
    %s17 = scalar_lea.sflag [#allocation6], 1
    %18 = vsyncpa %s17, 0
    loop: start=0, step=1, limit=4
    $region2: #{tpu_custom_call.1} parent=1 // loop_pre_header
      _
    $region3: #{tpu_custom_call.1} parent=1 // loop_header
      %s20 = sphi 0, %s24
      %p21 = scmp.ge.s32.totalorder %s20, 4
      %s30 = sphi 0, %s32
      %s33 = sphi 0, %s30
      %s34 = sphi 0, %s33
      %s50 = sphi 0, %s34
      %s56 = sphi 0, %s58
      %s59 = sphi 0, %s56
      %s60 = sphi 0, %s59
      %s76 = sphi 0, %s60
      %s80 = sphi 0, %s80
      %s82 = sphi 0, %s80
      %s83 = sphi 0, %s82
      %s97 = sphi 0, %s83
      %s101 = sphi 0, %s101
      %s103 = sphi 0, %s101
      %s104 = sphi 0, %s103
      %s118 = sphi 0, %s104
      %s122 = sphi 0, %s122
      %s124 = sphi 0, %s122
      %s125 = sphi 0, %s124
      %s139 = sphi 0, %s125
      %s143 = sphi 0, %s143
      %s145 = sphi 0, %s143
      %s146 = sphi 0, %s145
      %s160 = sphi 0, %s146
      %s164 = sphi 0, %s164
      %s166 = sphi 0, %s164
      %s167 = sphi 0, %s166
      %s181 = sphi 0, %s167
      %s187 = sphi 0, %s189
      %s190 = sphi 0, %s187
      %s191 = sphi 0, %s190
      %s207 = sphi 0, %s191
    $region4: #{tpu_custom_call.1} parent=1 // loop_header_branch
      %23 = sbr.rel (%p21) target = $region8
    $region5: #{tpu_custom_call.1} parent=1 // loop_body
      %s25 = ssub.s32 %s20, 1
      %s26 = ssub.s32 %s20, 2
      %s27 = sadd.s32 %s20, 1
      %s28 = ssub.s32 %s20, %s27
      %p29 = scmp.eq.s32.totalorder %s28, 0
      %s31 = sadd.s32 %s30, 1
      %s32 = scalar_select %p29, %s30, %s31
      %p35 = pneg %p29
      %p36 = scmp.eq.s32.totalorder %s20, 1
      %p37 = por %p35, %p36
      %p38 = scmp.ne.s32.totalorder %s30, %s33
      %p39 = scmp.eq.s32.totalorder %s20, 0
      %p40 = por %p38, %p39
      %p41 = scmp.ne.s32.totalorder %s30, %s33
      %p42 = scmp.eq.s32.totalorder %s25, 1
      %p43 = por %p41, %p42
      %p44 = scmp.ne.s32.totalorder %s33, %s34
      %p45 = scmp.eq.s32.totalorder %s25, 0
      %p46 = por %p44, %p45
      %p47 = scmp.ne.s32.totalorder %s33, %s34
      %p48 = scmp.eq.s32.totalorder %s26, 1
      %p49 = por %p47, %p48
      %p51 = scmp.ne.s32.totalorder %s34, %s50
      %p52 = scmp.eq.s32.totalorder %s26, 0
      %p53 = por %p51, %p52
      %s54 = ssub.s32 %s20, %s27
      %p55 = scmp.eq.s32.totalorder %s54, 0
      %s57 = sadd.s32 %s56, 1
      %s58 = scalar_select %p55, %s56, %s57
      %p61 = pneg %p55
      %p62 = scmp.eq.s32.totalorder %s20, 1
      %p63 = por %p61, %p62
      %p64 = scmp.ne.s32.totalorder %s56, %s59
      %p65 = scmp.eq.s32.totalorder %s20, 0
      %p66 = por %p64, %p65
      %p67 = scmp.ne.s32.totalorder %s56, %s59
      %p68 = scmp.eq.s32.totalorder %s25, 1
      %p69 = por %p67, %p68
      %p70 = scmp.ne.s32.totalorder %s59, %s60
      %p71 = scmp.eq.s32.totalorder %s25, 0
      %p72 = por %p70, %p71
      %p73 = scmp.ne.s32.totalorder %s59, %s60
      %p74 = scmp.eq.s32.totalorder %s26, 1
      %p75 = por %p73, %p74
      %p77 = scmp.ne.s32.totalorder %s60, %s76
      %p78 = scmp.eq.s32.totalorder %s26, 0
      %p79 = por %p77, %p78
      %s81 = sadd.s32 %s80, 1
      %p84 = scmp.eq.s32.totalorder %s20, 1
      %p85 = scmp.ne.s32.totalorder %s80, %s82
      %p86 = scmp.eq.s32.totalorder %s20, 0
      %p87 = por %p85, %p86
      %p88 = scmp.ne.s32.totalorder %s80, %s82
      %p89 = scmp.eq.s32.totalorder %s25, 1
      %p90 = por %p88, %p89
      %p91 = scmp.ne.s32.totalorder %s82, %s83
      %p92 = scmp.eq.s32.totalorder %s25, 0
      %p93 = por %p91, %p92
      %p94 = scmp.ne.s32.totalorder %s82, %s83
      %p95 = scmp.eq.s32.totalorder %s26, 1
      %p96 = por %p94, %p95
      %p98 = scmp.ne.s32.totalorder %s83, %s97
      %p99 = scmp.eq.s32.totalorder %s26, 0
      %p100 = por %p98, %p99
      %s102 = sadd.s32 %s101, 1
      %p105 = scmp.eq.s32.totalorder %s20, 1
      %p106 = scmp.ne.s32.totalorder %s101, %s103
      %p107 = scmp.eq.s32.totalorder %s20, 0
      %p108 = por %p106, %p107
      %p109 = scmp.ne.s32.totalorder %s101, %s103
      %p110 = scmp.eq.s32.totalorder %s25, 1
      %p111 = por %p109, %p110
      %p112 = scmp.ne.s32.totalorder %s103, %s104
      %p113 = scmp.eq.s32.totalorder %s25, 0
      %p114 = por %p112, %p113
      %p115 = scmp.ne.s32.totalorder %s103, %s104
      %p116 = scmp.eq.s32.totalorder %s26, 1
      %p117 = por %p115, %p116
      %p119 = scmp.ne.s32.totalorder %s104, %s118
      %p120 = scmp.eq.s32.totalorder %s26, 0
      %p121 = por %p119, %p120
      %s123 = sadd.s32 %s122, 1
      %p126 = scmp.eq.s32.totalorder %s20, 1
      %p127 = scmp.ne.s32.totalorder %s122, %s124
      %p128 = scmp.eq.s32.totalorder %s20, 0
      %p129 = por %p127, %p128
      %p130 = scmp.ne.s32.totalorder %s122, %s124
      %p131 = scmp.eq.s32.totalorder %s25, 1
      %p132 = por %p130, %p131
      %p133 = scmp.ne.s32.totalorder %s124, %s125
      %p134 = scmp.eq.s32.totalorder %s25, 0
      %p135 = por %p133, %p134
      %p136 = scmp.ne.s32.totalorder %s124, %s125
      %p137 = scmp.eq.s32.totalorder %s26, 1
      %p138 = por %p136, %p137
      %p140 = scmp.ne.s32.totalorder %s125, %s139
      %p141 = scmp.eq.s32.totalorder %s26, 0
      %p142 = por %p140, %p141
      %s144 = sadd.s32 %s143, 1
      %p147 = scmp.eq.s32.totalorder %s20, 1
      %p148 = scmp.ne.s32.totalorder %s143, %s145
      %p149 = scmp.eq.s32.totalorder %s20, 0
      %p150 = por %p148, %p149
      %p151 = scmp.ne.s32.totalorder %s143, %s145
      %p152 = scmp.eq.s32.totalorder %s25, 1
      %p153 = por %p151, %p152
      %p154 = scmp.ne.s32.totalorder %s145, %s146
      %p155 = scmp.eq.s32.totalorder %s25, 0
      %p156 = por %p154, %p155
      %p157 = scmp.ne.s32.totalorder %s145, %s146
      %p158 = scmp.eq.s32.totalorder %s26, 1
      %p159 = por %p157, %p158
      %p161 = scmp.ne.s32.totalorder %s146, %s160
      %p162 = scmp.eq.s32.totalorder %s26, 0
      %p163 = por %p161, %p162
      %s165 = sadd.s32 %s164, 1
      %p168 = scmp.eq.s32.totalorder %s20, 1
      %p169 = scmp.ne.s32.totalorder %s164, %s166
      %p170 = scmp.eq.s32.totalorder %s20, 0
      %p171 = por %p169, %p170
      %p172 = scmp.ne.s32.totalorder %s164, %s166
      %p173 = scmp.eq.s32.totalorder %s25, 1
      %p174 = por %p172, %p173
      %p175 = scmp.ne.s32.totalorder %s166, %s167
      %p176 = scmp.eq.s32.totalorder %s25, 0
      %p177 = por %p175, %p176
      %p178 = scmp.ne.s32.totalorder %s166, %s167
      %p179 = scmp.eq.s32.totalorder %s26, 1
      %p180 = por %p178, %p179
      %p182 = scmp.ne.s32.totalorder %s167, %s181
      %p183 = scmp.eq.s32.totalorder %s26, 0
      %p184 = por %p182, %p183
      %s185 = ssub.s32 %s20, %s27
      %p186 = scmp.eq.s32.totalorder %s185, 0
      %s188 = sadd.s32 %s187, 1
      %s189 = scalar_select %p186, %s187, %s188
      %p192 = pneg %p186
      %p193 = scmp.eq.s32.totalorder %s20, 1
      %p194 = por %p192, %p193
      %p195 = scmp.ne.s32.totalorder %s187, %s190
      %p196 = scmp.eq.s32.totalorder %s20, 0
      %p197 = por %p195, %p196
      %p198 = scmp.ne.s32.totalorder %s187, %s190
      %p199 = scmp.eq.s32.totalorder %s25, 1
      %p200 = por %p198, %p199
      %p201 = scmp.ne.s32.totalorder %s190, %s191
      %p202 = scmp.eq.s32.totalorder %s25, 0
      %p203 = por %p201, %p202
      %p204 = scmp.ne.s32.totalorder %s190, %s191
      %p205 = scmp.eq.s32.totalorder %s26, 1
      %p206 = por %p204, %p205
      %p208 = scmp.ne.s32.totalorder %s191, %s207
      %p209 = scmp.eq.s32.totalorder %s26, 0
      %p210 = por %p208, %p209
      %p211 = scmp.le.s32.totalorder 1, %s20
      %p212 = scmp.lt.s32.totalorder %s20, 3
      %p213 = pnand %p211, %p212
      %p214 = pneg %p213
      // Predicated region
      $region9: #{tpu_custom_call.1} parent=5 // pred_check
        _
      $region10: #{tpu_custom_call.1} parent=5 // pred_check_branch
        %216 = sbr.rel (%p213) target = $region12
      $region11: #{tpu_custom_call.1} parent=5 // pred_region
        %s217 = ssub.s32 %s20, 1
        // Predicated region
        $region13: #{tpu_custom_call.1} parent=11 // pred_check
          %p218 = pneg %p93
        $region14: #{tpu_custom_call.1} parent=11 // pred_check_branch
          %220 = sbr.rel (%p218) target = $region16
        $region15: #{tpu_custom_call.1} parent=11 // pred_region
          %s222 = ssub.s32 1024, 1024
          %223 = vsyncadd [#allocation8], %s222
          %s224 = sshll.u32 [#allocation7], 4
          %s225 = int_to_ptr.vmem [resolvable:$true] %s224
          %230 = dma.hbm_to_vmem [thread:$0]  %s2, 1024, %s225, [#allocation8], 128, 128, 8
        $region16: #{tpu_custom_call.1} parent=11 // pred_fallthru
          _
        // Predicated region
        $region17: #{tpu_custom_call.1} parent=11 // pred_check
          %p231 = pneg %p114
        $region18: #{tpu_custom_call.1} parent=11 // pred_check_branch
          %233 = sbr.rel (%p231) target = $region20
        $region19: #{tpu_custom_call.1} parent=11 // pred_region
          _
        $region20: #{tpu_custom_call.1} parent=11 // pred_fallthru
          _
        // Predicated region
        $region21: #{tpu_custom_call.1} parent=11 // pred_check
          %p234 = pneg %p135
        $region22: #{tpu_custom_call.1} parent=11 // pred_check_branch
          %236 = sbr.rel (%p234) target = $region24
        $region23: #{tpu_custom_call.1} parent=11 // pred_region
          _
        $region24: #{tpu_custom_call.1} parent=11 // pred_fallthru
          _
        // Predicated region
        $region25: #{tpu_custom_call.1} parent=11 // pred_check
          %p237 = pneg %p156
        $region26: #{tpu_custom_call.1} parent=11 // pred_check_branch
          %239 = sbr.rel (%p237) target = $region28
        $region27: #{tpu_custom_call.1} parent=11 // pred_region
          _
        $region28: #{tpu_custom_call.1} parent=11 // pred_fallthru
          _
        // Predicated region
        $region29: #{tpu_custom_call.1} parent=11 // pred_check
          %p240 = pneg %p177
        $region30: #{tpu_custom_call.1} parent=11 // pred_check_branch
          %242 = sbr.rel (%p240) target = $region32
        $region31: #{tpu_custom_call.1} parent=11 // pred_region
          _
        $region32: #{tpu_custom_call.1} parent=11 // pred_fallthru
          _
      $region12: #{tpu_custom_call.1} parent=5 // pred_fallthru
        _
      %p243 = scmp.lt.s32.totalorder %s20, 2
      // Predicated region
      $region33: #{tpu_custom_call.1} parent=5 // pred_check
        %p244 = pneg %p243
      $region34: #{tpu_custom_call.1} parent=5 // pred_check_branch
        %246 = sbr.rel (%p244) target = $region36
      $region35: #{tpu_custom_call.1} parent=5 // pred_region
        // Predicated region
        $region37: #{tpu_custom_call.1} parent=35 // pred_check
          %p247 = pneg %p40
        $region38: #{tpu_custom_call.1} parent=35 // pred_check_branch
          %249 = sbr.rel (%p247) target = $region40
        $region39: #{tpu_custom_call.1} parent=35 // pred_region
          %s250 = smul.u32 2, %s20
          %p251 = scmp.lt.s32.totalorder %s250, 3
          %s252 = scalar_select %p251, %s250, 3
          %s253 = smul.addr %s252, 4
          %s254 = scalar_lea.vmem %s0, %s253
          %s255 = smul.u32 2, %s20
        $region40: #{tpu_custom_call.1} parent=35 // pred_fallthru
          _
        // Predicated region
        $region41: #{tpu_custom_call.1} parent=35 // pred_check
          %p256 = pneg %p66
        $region42: #{tpu_custom_call.1} parent=35 // pred_check_branch
          %258 = sbr.rel (%p256) target = $region44
        $region43: #{tpu_custom_call.1} parent=35 // pred_region
          %s259 = sand.u32 %s56, 1
          %s260 = scalar_lea.sflag [#allocation5], %s259
          %s261 = sand.u32 %s56, 1
          %s262 = smul.addr %s261, 16
          %s263 = scalar_lea.vmem [#allocation4], %s262
          %s264 = smul.u32 2, %s20
          %s266 = ssub.s32 256, 256
          %267 = vsyncadd %s260, %s266
          %s268 = smul.addr %s264, 2
          %s269 = smul.addr %s268, 64
          %s270 = scalar_lea.hbm %s1, %s269
          %s271 = sshll.u32 %s263, 4
          %s272 = int_to_ptr.vmem [resolvable:$true] %s271
          %277 = dma.hbm_to_vmem [thread:$0]  %s270, 256, %s272, %s260, 128, 128, 8
        $region44: #{tpu_custom_call.1} parent=35 // pred_fallthru
          _
      $region36: #{tpu_custom_call.1} parent=5 // pred_fallthru
        _
      %p278 = scmp.le.s32.totalorder 1, %s20
      %p279 = scmp.lt.s32.totalorder %s20, 3
      %p280 = pnand %p278, %p279
      %p281 = pneg %p280
      // Predicated region
      $region45: #{tpu_custom_call.1} parent=5 // pred_check
        _
      $region46: #{tpu_custom_call.1} parent=5 // pred_check_branch
        %283 = sbr.rel (%p280) target = $region48
      $region47: #{tpu_custom_call.1} parent=5 // pred_region
        %s284 = ssub.s32 %s20, 1
        %s285 = sand.u32 %s59, 1
        %s286 = scalar_lea.sflag [#allocation5], %s285
        %s287 = sand.u32 %s59, 1
        %s288 = smul.addr %s287, 16
        %s289 = scalar_lea.vmem [#allocation4], %s288
        // Predicated region
        $region49: #{tpu_custom_call.1} parent=47 // pred_check
          %p290 = pneg %p72
        $region50: #{tpu_custom_call.1} parent=47 // pred_check_branch
          %292 = sbr.rel (%p290) target = $region52
        $region51: #{tpu_custom_call.1} parent=47 // pred_region
          %293 = dma.done %s286, 256
        $region52: #{tpu_custom_call.1} parent=47 // pred_fallthru
          _
        // Predicated region
        $region53: #{tpu_custom_call.1} parent=47 // pred_check
          %p294 = pneg %p93
        $region54: #{tpu_custom_call.1} parent=47 // pred_check_branch
          %296 = sbr.rel (%p294) target = $region56
        $region55: #{tpu_custom_call.1} parent=47 // pred_region
          %297 = dma.done [#allocation8], 1024
        $region56: #{tpu_custom_call.1} parent=47 // pred_fallthru
          _
        %s298 = smul.u32 2, %s25
        %p299 = scmp.lt.s32.totalorder %s298, 3
        %s300 = scalar_select %p299, %s298, 3
        %s301 = smul.addr %s300, 4
        %s302 = scalar_lea.vmem %s0, %s301
        %p303 = pneg %p46
        %p304 = pneg %p43
        %s305 = sand.u32 %s59, 1
        %s306 = scalar_lea.sflag [#allocation5], %s305
        %s307 = sand.u32 %s59, 1
        %s308 = smul.addr %s307, 16
        %s309 = scalar_lea.vmem [#allocation4], %s308
        %p310 = pneg %p72
        %p311 = pneg %p69
        %p312 = pneg %p93
        %p313 = pneg %p90
        %p314 = pneg %p114
        %p315 = pneg %p111
        %p316 = pneg %p135
        %p317 = pneg %p132
        %p318 = pneg %p156
        %p319 = pneg %p153
        %p320 = pneg %p177
        %p321 = pneg %p174
        %p322 = pneg %p203
        %p323 = pneg %p200
        %s324 = sand.u32 %s190, 1
        %s325 = scalar_lea.sflag [#allocation6], %s324
        %s326 = sand.u32 %s190, 1
        %s327 = smul.addr %s326, 32
        %s328 = scalar_lea.vmem [#allocation9], %s327
        %s329 = smul.u32 2, %s25
        %p330 = scmp.lt.s32.totalorder %s329, 3
        %s331 = scalar_select %p330, %s329, 3
        %s332 = smul.addr %s331, 4
        %s333 = scalar_lea.vmem %s0, %s332
        %s334 = smul.u32 2, %s25
        %s335 = smul.u32 2, %s25
        %s336 = smul.u32 2, %s25
        %340 = vst [vmem:[#allocation2] sm:$0xff] 0
        %341 = vst [vmem:[#allocation2 + $0x38] sm:$0xff] 0
        %342 = vst [vmem:[#allocation3] sm:$0xf] 0
        %343 = vst [vmem:[#allocation3 + $0x1c] sm:$0xf] 0
        %v344 = vld [vmem:[%s333] sm:$0xf]
        %v345 = vld [vmem:[#allocation7] sm:$0xff]
        %v346 = vld [vmem:[#allocation7 + $0x8] sm:$0xff]
        %v347 = vld [vmem:[#allocation7 + $0x10] sm:$0xff]
        %v348 = vld [vmem:[#allocation7 + $0x18] sm:$0xff]
        %v349 = vld [vmem:[#allocation7 + $0x20] sm:$0xff]
        %v350 = vld [vmem:[#allocation7 + $0x28] sm:$0xff]
        %v351 = vld [vmem:[#allocation7 + $0x30] sm:$0xff]
        %v352 = vld [vmem:[#allocation7 + $0x38] sm:$0xff]
        %v361 = vunpack.c.l.b16 %v345
        %v362 = vunpack.c.h.b16 %v345
        %v363 = vunpack.c.l.b16 %v346
        %v364 = vunpack.c.h.b16 %v346
        %v365 = vunpack.c.l.b16 %v347
        %v366 = vunpack.c.h.b16 %v347
        %v367 = vunpack.c.l.b16 %v348
        %v368 = vunpack.c.h.b16 %v348
        %v369 = vunpack.c.l.b16 %v349
        %v370 = vunpack.c.h.b16 %v349
        %v371 = vunpack.c.l.b16 %v350
        %v372 = vunpack.c.h.b16 %v350
        %v373 = vunpack.c.l.b16 %v351
        %v374 = vunpack.c.h.b16 %v351
        %v375 = vunpack.c.l.b16 %v352
        %v376 = vunpack.c.h.b16 %v352
        %v377 = vpack.c.b16 %v363, %v361
        %v378 = vpack.c.b16 %v364, %v362
        %v379 = vpack.c.b16 %v367, %v365
        %v380 = vpack.c.b16 %v368, %v366
        %v381 = vpack.c.b16 %v371, %v369
        %v382 = vpack.c.b16 %v372, %v370
        %v383 = vpack.c.b16 %v375, %v373
        %v384 = vpack.c.b16 %v376, %v374
        %vm393 = vcmask 523264
        %v395 = vsel %vm393, %v344, 0
        %397 = vmatprep.subr.bf16.mxu0 %v378
        %398 = vmatpush1.bf16.msra.mxu0 %v377
        %399 = vmatprep.subr.bf16.mxu0 %v380
        %400 = vmatpush1.bf16.msra.mxu0 %v379
        %401 = vmatprep.subr.bf16.mxu0 %v382
        %402 = vmatpush1.bf16.msra.mxu0 %v381
        %403 = vmatprep.subr.bf16.mxu0 %v384
        %404 = vmatpush1.bf16.msra.mxu0 %v383
        %405 = vmatprep.subr.bf16.mxu0 0
        %406 = vmatpush1.bf16.msra.mxu0 0
        %407 = vmatprep.subr.bf16.mxu0 0
        %408 = vmatpush1.bf16.msra.mxu0 0
        %409 = vmatprep.subr.bf16.mxu0 0
        %410 = vmatpush1.bf16.msra.mxu0 0
        %411 = vmatprep.subr.bf16.mxu0 0
        %412 = vmatpush1.bf16.msra.mxu0 0
        %413 = vmatprep.subr.bf16.mxu0 0
        %414 = vmatpush1.bf16.msra.mxu0 0
        %415 = vmatprep.subr.bf16.mxu0 0
        %416 = vmatpush1.bf16.msra.mxu0 0
        %417 = vmatprep.subr.bf16.mxu0 0
        %418 = vmatpush1.bf16.msra.mxu0 0
        %419 = vmatprep.subr.bf16.mxu0 0
        %420 = vmatpush1.bf16.msra.mxu0 0
        %421 = vmatprep.subr.bf16.mxu0 0
        %422 = vmatpush1.bf16.msra.mxu0 0
        %423 = vmatprep.subr.bf16.mxu0 0
        %424 = vmatpush1.bf16.msra.mxu0 0
        %425 = vmatprep.subr.bf16.mxu0 0
        %426 = vmatpush1.bf16.msra.mxu0 0
        %427 = vmatprep.subr.bf16.mxu0 0
        %428 = vmatpush1.bf16.msra.mxu0 0
        %429 = vmatprep.mubr.bf16.mxu0 0
        %430 = vmatmul.mubr.bf16.gmra.mrb[0].mxu0 %v395
        %v431 = vpop.f32.mrb[0].mxu0
        %v432 = vadd.f32 0.0, %v431
        %v433 = vpop.f32.mrb[0].mxu0
        %v434 = vadd.f32 0.0, %v433
        %v435 = vpop.f32.mrb[0].mxu0
        %v436 = vpop.f32.mrb[0].mxu0
        %437 = vdwg.mxu0
        %v438 = vld [vmem:[%s289] sm:$0xff]
        %v439 = vpack.c.bf16 %v432, %v432
        %v440 = vpack.c.bf16 %v434, %v434
        %v442 = vunpack.c.l.b16 %v438
        %v443 = vunpack.c.h.b16 %v438
        %v444 = vpack.c.b16 %v442, %v442
        %v445 = vpack.c.b16 %v443, %v443
        %v448 = vrot.slane %v439, 4
        %v449 = vrot.slane %v440, 4
        %vm450 = vcmask 1043456
        %v453 = vsel %vm450, %v444, %v448
        %v457 = vsel %vm450, %v445, %v449
        %459 = vst [vmem:[#allocation2 + $0x8] sm:$0xff] %v453
        %460 = vst [vmem:[#allocation2 + $0x10] sm:$0xff] %v457
        %461 = vst [vmem:[#allocation2 + $0x18] sm:$0xff] 0
        %s462 = scalar_lea.vmem %s333, 4
        %v463 = vld [vmem:[%s462] sm:$0xf]
        %v464 = vld [vmem:[#allocation7] sm:$0xff]
        %v465 = vld [vmem:[#allocation7 + $0x8] sm:$0xff]
        %v466 = vld [vmem:[#allocation7 + $0x10] sm:$0xff]
        %v467 = vld [vmem:[#allocation7 + $0x18] sm:$0xff]
        %v468 = vld [vmem:[#allocation7 + $0x20] sm:$0xff]
        %v469 = vld [vmem:[#allocation7 + $0x28] sm:$0xff]
        %v470 = vld [vmem:[#allocation7 + $0x30] sm:$0xff]
        %v471 = vld [vmem:[#allocation7 + $0x38] sm:$0xff]
        %v480 = vunpack.c.l.b16 %v464
        %v481 = vunpack.c.h.b16 %v464
        %v482 = vunpack.c.l.b16 %v465
        %v483 = vunpack.c.h.b16 %v465
        %v484 = vunpack.c.l.b16 %v466
        %v485 = vunpack.c.h.b16 %v466
        %v486 = vunpack.c.l.b16 %v467
        %v487 = vunpack.c.h.b16 %v467
        %v488 = vunpack.c.l.b16 %v468
        %v489 = vunpack.c.h.b16 %v468
        %v490 = vunpack.c.l.b16 %v469
        %v491 = vunpack.c.h.b16 %v469
        %v492 = vunpack.c.l.b16 %v470
        %v493 = vunpack.c.h.b16 %v470
        %v494 = vunpack.c.l.b16 %v471
        %v495 = vunpack.c.h.b16 %v471
        %v496 = vpack.c.b16 %v482, %v480
        %v497 = vpack.c.b16 %v483, %v481
        %v498 = vpack.c.b16 %v486, %v484
        %v499 = vpack.c.b16 %v487, %v485
        %v500 = vpack.c.b16 %v490, %v488
        %v501 = vpack.c.b16 %v491, %v489
        %v502 = vpack.c.b16 %v494, %v492
        %v503 = vpack.c.b16 %v495, %v493
        %v513 = vsel %vm393, %v463, 0
        %515 = vmatprep.subr.bf16.mxu0 %v497
        %516 = vmatpush1.bf16.msra.mxu0 %v496
        %517 = vmatprep.subr.bf16.mxu0 %v499
        %518 = vmatpush1.bf16.msra.mxu0 %v498
        %519 = vmatprep.subr.bf16.mxu0 %v501
        %520 = vmatpush1.bf16.msra.mxu0 %v500
        %521 = vmatprep.subr.bf16.mxu0 %v503
        %522 = vmatpush1.bf16.msra.mxu0 %v502
        %523 = vmatprep.subr.bf16.mxu0 0
        %524 = vmatpush1.bf16.msra.mxu0 0
        %525 = vmatprep.subr.bf16.mxu0 0
        %526 = vmatpush1.bf16.msra.mxu0 0
        %527 = vmatprep.subr.bf16.mxu0 0
        %528 = vmatpush1.bf16.msra.mxu0 0
        %529 = vmatprep.subr.bf16.mxu0 0
        %530 = vmatpush1.bf16.msra.mxu0 0
        %531 = vmatprep.subr.bf16.mxu0 0
        %532 = vmatpush1.bf16.msra.mxu0 0
        %533 = vmatprep.subr.bf16.mxu0 0
        %534 = vmatpush1.bf16.msra.mxu0 0
        %535 = vmatprep.subr.bf16.mxu0 0
        %536 = vmatpush1.bf16.msra.mxu0 0
        %537 = vmatprep.subr.bf16.mxu0 0
        %538 = vmatpush1.bf16.msra.mxu0 0
        %539 = vmatprep.subr.bf16.mxu0 0
        %540 = vmatpush1.bf16.msra.mxu0 0
        %541 = vmatprep.subr.bf16.mxu0 0
        %542 = vmatpush1.bf16.msra.mxu0 0
        %543 = vmatprep.subr.bf16.mxu0 0
        %544 = vmatpush1.bf16.msra.mxu0 0
        %545 = vmatprep.subr.bf16.mxu0 0
        %546 = vmatpush1.bf16.msra.mxu0 0
        %547 = vmatprep.mubr.bf16.mxu0 0
        %548 = vmatmul.mubr.bf16.gmra.mrb[0].mxu0 %v513
        %v549 = vpop.f32.mrb[0].mxu0
        %v550 = vadd.f32 0.0, %v549
        %v551 = vpop.f32.mrb[0].mxu0
        %v552 = vadd.f32 0.0, %v551
        %v553 = vpop.f32.mrb[0].mxu0
        %v554 = vpop.f32.mrb[0].mxu0
        %555 = vdwg.mxu0
        %s556 = scalar_lea.vmem %s289, 8 [#allocation4]
        %v557 = vld [vmem:[%s556] sm:$0xff]
        %v558 = vpack.c.bf16 %v550, %v550
        %v559 = vpack.c.bf16 %v552, %v552
        %v561 = vunpack.c.l.b16 %v557
        %v562 = vunpack.c.h.b16 %v557
        %v563 = vpack.c.b16 %v561, %v561
        %v564 = vpack.c.b16 %v562, %v562
        %v567 = vrot.slane %v558, 4
        %v568 = vrot.slane %v559, 4
        %v571 = vsel %vm450, %v563, %v567
        %v575 = vsel %vm450, %v564, %v568
        %577 = vst [vmem:[#allocation2 + $0x20] sm:$0xff] %v571
        %578 = vst [vmem:[#allocation2 + $0x28] sm:$0xff] %v575
        %579 = vst [vmem:[#allocation2 + $0x30] sm:$0xff] 0
        %v580 = vlaneseq
        %v581 = vand.u32 %v580, 127
        %v582 = vadd.s32 %v581, 128
        %v583 = vadd.s32 %v581, 256
        %v584 = vadd.s32 %v581, 384
        %v585 = vadd.s32 %v581, 512
        %v586 = vadd.s32 %v581, 640
        %vm587 = vcmp.lt.s32.totalorder %v581, 0
        %v588 = vsub.s32 0, %v581
        %v589 = vsel %vm587, %v588, %v581
        %v590 = vshrl.u32 %v589, 4
        %v591 = vand.u32 %v589, 15
        %v592 = vsub.s32 0, %v591
        %v593 = vsel %vm587, %v592, %v591
        %vm594 = vcmp.lt.s32.totalorder %v582, 0
        %v595 = vsub.s32 0, %v582
        %v596 = vsel %vm594, %v595, %v582
        %v597 = vshrl.u32 %v596, 4
        %v598 = vand.u32 %v596, 15
        %v599 = vsub.s32 0, %v598
        %v600 = vsel %vm594, %v599, %v598
        %vm601 = vcmp.lt.s32.totalorder %v583, 0
        %v602 = vsub.s32 0, %v583
        %v603 = vsel %vm601, %v602, %v583
        %v604 = vshrl.u32 %v603, 4
        %v605 = vand.u32 %v603, 15
        %v606 = vsub.s32 0, %v605
        %v607 = vsel %vm601, %v606, %v605
        %vm608 = vcmp.lt.s32.totalorder %v584, 0
        %v609 = vsub.s32 0, %v584
        %v610 = vsel %vm608, %v609, %v584
        %v611 = vshrl.u32 %v610, 4
        %v612 = vand.u32 %v610, 15
        %v613 = vsub.s32 0, %v612
        %v614 = vsel %vm608, %v613, %v612
        %vm615 = vcmp.lt.s32.totalorder %v585, 0
        %v616 = vsub.s32 0, %v585
        %v617 = vsel %vm615, %v616, %v585
        %v618 = vshrl.u32 %v617, 4
        %v619 = vand.u32 %v617, 15
        %v620 = vsub.s32 0, %v619
        %v621 = vsel %vm615, %v620, %v619
        %vm622 = vcmp.lt.s32.totalorder %v586, 0
        %v623 = vsub.s32 0, %v586
        %v624 = vsel %vm622, %v623, %v586
        %v625 = vshrl.u32 %v624, 4
        %v626 = vand.u32 %v624, 15
        %v627 = vsub.s32 0, %v626
        %v628 = vsel %vm622, %v627, %v626
        %vm629 = vcmp.ne.s32.totalorder %v593, 0
        %vm630 = vcmp.ne.s32.totalorder %v600, 0
        %vm631 = vcmp.ne.s32.totalorder %v607, 0
        %vm632 = vcmp.ne.s32.totalorder %v614, 0
        %vm633 = vcmp.ne.s32.totalorder %v621, 0
        %vm634 = vcmp.ne.s32.totalorder %v628, 0
        %vm635 = vcmp.lt.s32.totalorder %v593, 0
        %vm636 = vcmp.lt.s32.totalorder %v600, 0
        %vm637 = vcmp.lt.s32.totalorder %v607, 0
        %vm638 = vcmp.lt.s32.totalorder %v614, 0
        %vm639 = vcmp.lt.s32.totalorder %v621, 0
        %vm640 = vcmp.lt.s32.totalorder %v628, 0
        %vm641 = vmand %vm635, %vm629
        %vm642 = vmand %vm636, %vm630
        %vm643 = vmand %vm637, %vm631
        %vm644 = vmand %vm638, %vm632
        %vm645 = vmand %vm639, %vm633
        %vm646 = vmand %vm640, %vm634
        %v647 = vadd.s32 %v593, 16
        %v648 = vadd.s32 %v600, 16
        %v649 = vadd.s32 %v607, 16
        %v650 = vadd.s32 %v614, 16
        %v651 = vadd.s32 %v621, 16
        %v652 = vadd.s32 %v628, 16
        %v653 = vsel %vm641, %v647, %v593
        %v654 = vsel %vm642, %v648, %v600
        %v655 = vsel %vm643, %v649, %v607
        %v656 = vsel %vm644, %v650, %v614
        %v657 = vsel %vm645, %v651, %v621
        %v658 = vsel %vm646, %v652, %v628
        %vm659 = vcmp.ge.s32.totalorder %v653, 1
        %vm660 = vcmp.ge.s32.totalorder %v654, 1
        %vm661 = vcmp.ge.s32.totalorder %v655, 1
        %vm662 = vcmp.ge.s32.totalorder %v656, 1
        %vm663 = vcmp.ge.s32.totalorder %v657, 1
        %vm664 = vcmp.ge.s32.totalorder %v658, 1
        %vm665 = vcmp.lt.s32.totalorder %v653, 15
        %vm666 = vcmp.lt.s32.totalorder %v654, 15
        %vm667 = vcmp.lt.s32.totalorder %v655, 15
        %vm668 = vcmp.lt.s32.totalorder %v656, 15
        %vm669 = vcmp.lt.s32.totalorder %v657, 15
        %vm670 = vcmp.lt.s32.totalorder %v658, 15
        %v671 = vld [vmem:[#allocation2] sm:$0xff]
        %v672 = vld [vmem:[#allocation2 + $0x8] sm:$0xff]
        %v673 = vld [vmem:[#allocation2 + $0x10] sm:$0xff]
        %v674 = vld [vmem:[#allocation2 + $0x18] sm:$0xff]
        %v675 = vld [vmem:[#allocation2 + $0x20] sm:$0xff]
        %v676 = vld [vmem:[#allocation2 + $0x28] sm:$0xff]
        %v677 = vld [vmem:[#allocation2 + $0x30] sm:$0xff]
        %v678 = vsel %vm659, 1, 0
        %v679 = vsel %vm660, 1, 0
        %v680 = vsel %vm661, 1, 0
        %v681 = vsel %vm662, 1, 0
        %v682 = vsel %vm663, 1, 0
        %v683 = vsel %vm664, 1, 0
        %vm684 = vcmp.eq.s32.totalorder %v678, 1
        %vm685 = vcmp.eq.s32.totalorder %v679, 1
        %vm686 = vcmp.eq.s32.totalorder %v680, 1
        %vm687 = vcmp.eq.s32.totalorder %v681, 1
        %vm688 = vcmp.eq.s32.totalorder %v682, 1
        %vm689 = vcmp.eq.s32.totalorder %v683, 1
        %vm690 = vmpackc.low %vm685, %vm684
        %vm691 = vmpackc.low %vm687, %vm686
        %vm692 = vmpackc.low %vm689, %vm688
        %v693 = vsel %vm690, 65537, 0
        %v694 = vsel %vm691, 65537, 0
        %v695 = vsel %vm692, 65537, 0
        %v696 = vlaneseq
        %v697 = vshrl.u32 %v696, 7
        %v698 = vsub.s32 0, %v697
        %v699 = vrot.slane %v693, %v698
        %v700 = vlaneseq
        %v701 = vshrl.u32 %v700, 7
        %v702 = vsub.s32 4, %v701
        %v703 = vrot.slane %v693, %v702
        %v704 = vlaneseq
        %v705 = vshrl.u32 %v704, 7
        %v706 = vsub.s32 0, %v705
        %v707 = vrot.slane %v694, %v706
        %v708 = vlaneseq
        %v709 = vshrl.u32 %v708, 7
        %v710 = vsub.s32 4, %v709
        %v711 = vrot.slane %v694, %v710
        %v712 = vlaneseq
        %v713 = vshrl.u32 %v712, 7
        %v714 = vsub.s32 0, %v713
        %v715 = vrot.slane %v695, %v714
        %v716 = vlaneseq
        %v717 = vshrl.u32 %v716, 7
        %v718 = vsub.s32 4, %v717
        %v719 = vrot.slane %v695, %v718
        %720 = vrot.lane.b32.xlu0 %v699, 111
        %v721 = vpop.permute.xlu0 %720
        %722 = vrot.lane.b32.xlu0 %v703, 111
        %v723 = vpop.permute.xlu0 %722
        %724 = vrot.lane.b32.xlu0 %v707, 111
        %v725 = vpop.permute.xlu0 %724
        %726 = vrot.lane.b32.xlu0 %v711, 111
        %v727 = vpop.permute.xlu0 %726
        %728 = vrot.lane.b32.xlu0 %v715, 111
        %v729 = vpop.permute.xlu0 %728
        %730 = vrot.lane.b32.xlu0 %v719, 111
        %v731 = vpop.permute.xlu0 %730
        %vm732 = vcmask 908288
        %v733 = vsel %vm732, %v721, %v723
        %v734 = vsel %vm732, %v723, %v725
        %v735 = vsel %vm732, %v725, %v727
        %v736 = vsel %vm732, %v727, %v729
        %v737 = vsel %vm732, %v729, %v731
        %vm738 = vcmp.ne.s16.totalorder %v721, 0
        %vm739 = vcmp.ne.s16.totalorder %v733, 0
        %vm740 = vcmp.ne.s16.totalorder %v734, 0
        %vm741 = vcmp.ne.s16.totalorder %v735, 0
        %vm742 = vcmp.ne.s16.totalorder %v736, 0
        %vm743 = vcmp.ne.s16.totalorder %v737, 0
        %vm744 = vcmp.ne.s16.totalorder %v731, 0
        %v745 = vsel %vm738, %v671, 0
        %v746 = vsel %vm739, %v672, 0
        %v747 = vsel %vm740, %v673, 0
        %v748 = vsel %vm741, %v674, 0
        %v749 = vsel %vm742, %v675, 0
        %v750 = vsel %vm743, %v676, 0
        %v751 = vsel %vm744, %v677, 0
        %v752 = vsel %vm665, 1, 0
        %v753 = vsel %vm666, 1, 0
        %v754 = vsel %vm667, 1, 0
        %v755 = vsel %vm668, 1, 0
        %v756 = vsel %vm669, 1, 0
        %v757 = vsel %vm670, 1, 0
        %vm758 = vcmp.eq.s32.totalorder %v752, 1
        %vm759 = vcmp.eq.s32.totalorder %v753, 1
        %vm760 = vcmp.eq.s32.totalorder %v754, 1
        %vm761 = vcmp.eq.s32.totalorder %v755, 1
        %vm762 = vcmp.eq.s32.totalorder %v756, 1
        %vm763 = vcmp.eq.s32.totalorder %v757, 1
        %vm764 = vmpackc.low %vm759, %vm758
        %vm765 = vmpackc.low %vm761, %vm760
        %vm766 = vmpackc.low %vm763, %vm762
        %v767 = vsel %vm764, 65537, 0
        %v768 = vsel %vm765, 65537, 0
        %v769 = vsel %vm766, 65537, 0
        %v770 = vlaneseq
        %v771 = vshrl.u32 %v770, 7
        %v772 = vsub.s32 0, %v771
        %v773 = vrot.slane %v767, %v772
        %v774 = vlaneseq
        %v775 = vshrl.u32 %v774, 7
        %v776 = vsub.s32 4, %v775
        %v777 = vrot.slane %v767, %v776
        %v778 = vlaneseq
        %v779 = vshrl.u32 %v778, 7
        %v780 = vsub.s32 0, %v779
        %v781 = vrot.slane %v768, %v780
        %v782 = vlaneseq
        %v783 = vshrl.u32 %v782, 7
        %v784 = vsub.s32 4, %v783
        %v785 = vrot.slane %v768, %v784
        %v786 = vlaneseq
        %v787 = vshrl.u32 %v786, 7
        %v788 = vsub.s32 0, %v787
        %v789 = vrot.slane %v769, %v788
        %v790 = vlaneseq
        %v791 = vshrl.u32 %v790, 7
        %v792 = vsub.s32 4, %v791
        %v793 = vrot.slane %v769, %v792
        %794 = vrot.lane.b32.xlu0 %v773, 113
        %v795 = vpop.permute.xlu0 %794
        %796 = vrot.lane.b32.xlu0 %v777, 113
        %v797 = vpop.permute.xlu0 %796
        %798 = vrot.lane.b32.xlu0 %v781, 113
        %v799 = vpop.permute.xlu0 %798
        %800 = vrot.lane.b32.xlu0 %v785, 113
        %v801 = vpop.permute.xlu0 %800
        %802 = vrot.lane.b32.xlu0 %v789, 113
        %v803 = vpop.permute.xlu0 %802
        %804 = vrot.lane.b32.xlu0 %v793, 113
        %v805 = vpop.permute.xlu0 %804
        %vm806 = vcmask 924672
        %v807 = vsel %vm806, %v795, %v797
        %v808 = vsel %vm806, %v797, %v799
        %v809 = vsel %vm806, %v799, %v801
        %v810 = vsel %vm806, %v801, %v803
        %v811 = vsel %vm806, %v803, %v805
        %vm812 = vcmp.ne.s16.totalorder %v795, 0
        %vm813 = vcmp.ne.s16.totalorder %v807, 0
        %vm814 = vcmp.ne.s16.totalorder %v808, 0
        %vm815 = vcmp.ne.s16.totalorder %v809, 0
        %vm816 = vcmp.ne.s16.totalorder %v810, 0
        %vm817 = vcmp.ne.s16.totalorder %v811, 0
        %vm818 = vcmp.ne.s16.totalorder %v805, 0
        %v819 = vsel %vm812, %v671, 0
        %v820 = vsel %vm813, %v672, 0
        %v821 = vsel %vm814, %v673, 0
        %v822 = vsel %vm815, %v674, 0
        %v823 = vsel %vm816, %v675, 0
        %v824 = vsel %vm817, %v676, 0
        %v825 = vsel %vm818, %v677, 0
        %826 = vrot.lane.b32.xlu0 %v699, 127
        %v827 = vpop.permute.xlu0 %826
        %828 = vrot.lane.b32.xlu0 %v703, 127
        %v829 = vpop.permute.xlu0 %828
        %830 = vrot.lane.b32.xlu0 %v707, 127
        %v831 = vpop.permute.xlu0 %830
        %832 = vrot.lane.b32.xlu0 %v711, 127
        %v833 = vpop.permute.xlu0 %832
        %834 = vrot.lane.b32.xlu0 %v715, 127
        %v835 = vpop.permute.xlu0 %834
        %836 = vrot.lane.b32.xlu0 %v719, 127
        %v837 = vpop.permute.xlu0 %836
        %vm838 = vcmask 1039360
        %v839 = vsel %vm838, %v827, %v829
        %v840 = vsel %vm838, %v829, %v831
        %v841 = vsel %vm838, %v831, %v833
        %v842 = vsel %vm838, %v833, %v835
        %v843 = vsel %vm838, %v835, %v837
        %vm844 = vcmp.ne.s16.totalorder %v827, 0
        %vm845 = vcmp.ne.s16.totalorder %v839, 0
        %vm846 = vcmp.ne.s16.totalorder %v840, 0
        %vm847 = vcmp.ne.s16.totalorder %v841, 0
        %vm848 = vcmp.ne.s16.totalorder %v842, 0
        %vm849 = vcmp.ne.s16.totalorder %v843, 0
        %vm850 = vcmp.ne.s16.totalorder %v837, 0
        %v851 = vsel %vm844, %v671, 0
        %v852 = vsel %vm845, %v672, 0
        %v853 = vsel %vm846, %v673, 0
        %v854 = vsel %vm847, %v674, 0
        %v855 = vsel %vm848, %v675, 0
        %v856 = vsel %vm849, %v676, 0
        %v857 = vsel %vm850, %v677, 0
        %v858 = vld [vmem:[#allocation2 + $0x8] sm:$0xff]
        %v859 = vld [vmem:[#allocation2 + $0x10] sm:$0xff]
        %v860 = vld [vmem:[#allocation2 + $0x18] sm:$0xff]
        %v861 = vld [vmem:[#allocation2 + $0x20] sm:$0xff]
        %v862 = vld [vmem:[#allocation2 + $0x28] sm:$0xff]
        %v863 = vld [vmem:[#allocation2 + $0x30] sm:$0xff]
        %v864 = vld [vmem:[#allocation2 + $0x38] sm:$0xff]
        %865 = vrot.lane.b32.xlu0 %v773, 1
        %v866 = vpop.permute.xlu0 %865
        %867 = vrot.lane.b32.xlu0 %v777, 1
        %v868 = vpop.permute.xlu0 %867
        %869 = vrot.lane.b32.xlu0 %v781, 1
        %v870 = vpop.permute.xlu0 %869
        %871 = vrot.lane.b32.xlu0 %v785, 1
        %v872 = vpop.permute.xlu0 %871
        %873 = vrot.lane.b32.xlu0 %v789, 1
        %v874 = vpop.permute.xlu0 %873
        %875 = vrot.lane.b32.xlu0 %v793, 1
        %v876 = vpop.permute.xlu0 %875
        %vm877 = vcmask 7168
        %v878 = vsel %vm877, %v866, %v868
        %v879 = vsel %vm877, %v868, %v870
        %v880 = vsel %vm877, %v870, %v872
        %v881 = vsel %vm877, %v872, %v874
        %v882 = vsel %vm877, %v874, %v876
        %vm883 = vcmp.ne.s16.totalorder %v866, 0
        %vm884 = vcmp.ne.s16.totalorder %v878, 0
        %vm885 = vcmp.ne.s16.totalorder %v879, 0
        %vm886 = vcmp.ne.s16.totalorder %v880, 0
        %vm887 = vcmp.ne.s16.totalorder %v881, 0
        %vm888 = vcmp.ne.s16.totalorder %v882, 0
        %vm889 = vcmp.ne.s16.totalorder %v876, 0
        %v890 = vsel %vm883, %v858, 0
        %v891 = vsel %vm884, %v859, 0
        %v892 = vsel %vm885, %v860, 0
        %v893 = vsel %vm886, %v861, 0
        %v894 = vsel %vm887, %v862, 0
        %v895 = vsel %vm888, %v863, 0
        %v896 = vsel %vm889, %v864, 0
        %897 = vrot.lane.b32.xlu0 %v699, 15
        %v898 = vpop.permute.xlu0 %897
        %899 = vrot.lane.b32.xlu0 %v703, 15
        %v900 = vpop.permute.xlu0 %899
        %901 = vrot.lane.b32.xlu0 %v707, 15
        %v902 = vpop.permute.xlu0 %901
        %903 = vrot.lane.b32.xlu0 %v711, 15
        %v904 = vpop.permute.xlu0 %903
        %905 = vrot.lane.b32.xlu0 %v715, 15
        %v906 = vpop.permute.xlu0 %905
        %907 = vrot.lane.b32.xlu0 %v719, 15
        %v908 = vpop.permute.xlu0 %907
        %vm909 = vcmask 121856
        %v910 = vsel %vm909, %v898, %v900
        %v911 = vsel %vm909, %v900, %v902
        %v912 = vsel %vm909, %v902, %v904
        %v913 = vsel %vm909, %v904, %v906
        %v914 = vsel %vm909, %v906, %v908
        %vm915 = vcmp.ne.s16.totalorder %v898, 0
        %vm916 = vcmp.ne.s16.totalorder %v910, 0
        %vm917 = vcmp.ne.s16.totalorder %v911, 0
        %vm918 = vcmp.ne.s16.totalorder %v912, 0
        %vm919 = vcmp.ne.s16.totalorder %v913, 0
        %vm920 = vcmp.ne.s16.totalorder %v914, 0
        %vm921 = vcmp.ne.s16.totalorder %v908, 0
        %v922 = vsel %vm915, %v858, 0
        %v923 = vsel %vm916, %v859, 0
        %v924 = vsel %vm917, %v860, 0
        %v925 = vsel %vm918, %v861, 0
        %v926 = vsel %vm919, %v862, 0
        %v927 = vsel %vm920, %v863, 0
        %v928 = vsel %vm921, %v864, 0
        %929 = vrot.lane.b32.xlu0 %v773, 17
        %v930 = vpop.permute.xlu0 %929
        %931 = vrot.lane.b32.xlu0 %v777, 17
        %v932 = vpop.permute.xlu0 %931
        %933 = vrot.lane.b32.xlu0 %v781, 17
        %v934 = vpop.permute.xlu0 %933
        %935 = vrot.lane.b32.xlu0 %v785, 17
        %v936 = vpop.permute.xlu0 %935
        %937 = vrot.lane.b32.xlu0 %v789, 17
        %v938 = vpop.permute.xlu0 %937
        %939 = vrot.lane.b32.xlu0 %v793, 17
        %v940 = vpop.permute.xlu0 %939
        %vm941 = vcmask 138240
        %v942 = vsel %vm941, %v930, %v932
        %v943 = vsel %vm941, %v932, %v934
        %v944 = vsel %vm941, %v934, %v936
        %v945 = vsel %vm941, %v936, %v938
        %v946 = vsel %vm941, %v938, %v940
        %vm947 = vcmp.ne.s16.totalorder %v930, 0
        %vm948 = vcmp.ne.s16.totalorder %v942, 0
        %vm949 = vcmp.ne.s16.totalorder %v943, 0
        %vm950 = vcmp.ne.s16.totalorder %v944, 0
        %vm951 = vcmp.ne.s16.totalorder %v945, 0
        %vm952 = vcmp.ne.s16.totalorder %v946, 0
        %vm953 = vcmp.ne.s16.totalorder %v940, 0
        %v954 = vsel %vm947, %v858, 0
        %v955 = vsel %vm948, %v859, 0
        %v956 = vsel %vm949, %v860, 0
        %v957 = vsel %vm950, %v861, 0
        %v958 = vsel %vm951, %v862, 0
        %v959 = vsel %vm952, %v863, 0
        %v960 = vsel %vm953, %v864, 0
        %968 = vrot.lane.b32.xlu0 %v671, 127
        %v969 = vpop.permute.xlu0 %968
        %970 = vrot.lane.b32.xlu0 %v672, 127
        %v971 = vpop.permute.xlu0 %970
        %972 = vrot.lane.b32.xlu0 %v673, 127
        %v973 = vpop.permute.xlu0 %972
        %974 = vrot.lane.b32.xlu0 %v674, 127
        %v975 = vpop.permute.xlu0 %974
        %976 = vrot.lane.b32.xlu0 %v675, 127
        %v977 = vpop.permute.xlu0 %976
        %978 = vrot.lane.b32.xlu0 %v676, 127
        %v979 = vpop.permute.xlu0 %978
        %980 = vrot.lane.b32.xlu0 %v677, 127
        %v981 = vpop.permute.xlu0 %980
        %v982 = vsel %vm838, %v969, %v971
        %v983 = vsel %vm838, %v971, %v973
        %v984 = vsel %vm838, %v973, %v975
        %v985 = vsel %vm838, %v975, %v977
        %v986 = vsel %vm838, %v977, %v979
        %v987 = vsel %vm838, %v979, %v981
        %995 = vrot.lane.b32.xlu0 %v819, 126
        %v996 = vpop.permute.xlu0 %995
        %997 = vrot.lane.b32.xlu0 %v820, 126
        %v998 = vpop.permute.xlu0 %997
        %999 = vrot.lane.b32.xlu0 %v821, 126
        %v1000 = vpop.permute.xlu0 %999
        %1001 = vrot.lane.b32.xlu0 %v822, 126
        %v1002 = vpop.permute.xlu0 %1001
        %1003 = vrot.lane.b32.xlu0 %v823, 126
        %v1004 = vpop.permute.xlu0 %1003
        %1005 = vrot.lane.b32.xlu0 %v824, 126
        %v1006 = vpop.permute.xlu0 %1005
        %1007 = vrot.lane.b32.xlu0 %v825, 126
        %v1008 = vpop.permute.xlu0 %1007
        %vm1009 = vcmask 1031168
        %v1010 = vsel %vm1009, %v996, %v998
        %v1011 = vsel %vm1009, %v998, %v1000
        %v1012 = vsel %vm1009, %v1000, %v1002
        %v1013 = vsel %vm1009, %v1002, %v1004
        %v1014 = vsel %vm1009, %v1004, %v1006
        %v1015 = vsel %vm1009, %v1006, %v1008
        %1023 = vrot.lane.b32.xlu0 %v851, 112
        %v1024 = vpop.permute.xlu0 %1023
        %1025 = vrot.lane.b32.xlu0 %v852, 112
        %v1026 = vpop.permute.xlu0 %1025
        %1027 = vrot.lane.b32.xlu0 %v853, 112
        %v1028 = vpop.permute.xlu0 %1027
        %1029 = vrot.lane.b32.xlu0 %v854, 112
        %v1030 = vpop.permute.xlu0 %1029
        %1031 = vrot.lane.b32.xlu0 %v855, 112
        %v1032 = vpop.permute.xlu0 %1031
        %1033 = vrot.lane.b32.xlu0 %v856, 112
        %v1034 = vpop.permute.xlu0 %1033
        %1035 = vrot.lane.b32.xlu0 %v857, 112
        %v1036 = vpop.permute.xlu0 %1035
        %vm1037 = vcmask 916480
        %v1038 = vsel %vm1037, %v1024, %v1026
        %v1039 = vsel %vm1037, %v1026, %v1028
        %v1040 = vsel %vm1037, %v1028, %v1030
        %v1041 = vsel %vm1037, %v1030, %v1032
        %v1042 = vsel %vm1037, %v1032, %v1034
        %v1043 = vsel %vm1037, %v1034, %v1036
        %1044 = vrot.lane.b32.xlu0 %v672, 111
        %v1045 = vpop.permute.xlu0 %1044
        %1046 = vrot.lane.b32.xlu0 %v673, 111
        %v1047 = vpop.permute.xlu0 %1046
        %1048 = vrot.lane.b32.xlu0 %v674, 111
        %v1049 = vpop.permute.xlu0 %1048
        %1050 = vrot.lane.b32.xlu0 %v675, 111
        %v1051 = vpop.permute.xlu0 %1050
        %1052 = vrot.lane.b32.xlu0 %v676, 111
        %v1053 = vpop.permute.xlu0 %1052
        %1054 = vrot.lane.b32.xlu0 %v677, 111
        %v1055 = vpop.permute.xlu0 %1054
        %v1056 = vsel %vm732, %v1045, %v1047
        %v1057 = vsel %vm732, %v1047, %v1049
        %v1058 = vsel %vm732, %v1049, %v1051
        %v1059 = vsel %vm732, %v1051, %v1053
        %v1060 = vsel %vm732, %v1053, %v1055
        %1068 = vrot.lane.b32.xlu0 %v890, 110
        %v1069 = vpop.permute.xlu0 %1068
        %1070 = vrot.lane.b32.xlu0 %v891, 110
        %v1071 = vpop.permute.xlu0 %1070
        %1072 = vrot.lane.b32.xlu0 %v892, 110
        %v1073 = vpop.permute.xlu0 %1072
        %1074 = vrot.lane.b32.xlu0 %v893, 110
        %v1075 = vpop.permute.xlu0 %1074
        %1076 = vrot.lane.b32.xlu0 %v894, 110
        %v1077 = vpop.permute.xlu0 %1076
        %1078 = vrot.lane.b32.xlu0 %v895, 110
        %v1079 = vpop.permute.xlu0 %1078
        %1080 = vrot.lane.b32.xlu0 %v896, 110
        %v1081 = vpop.permute.xlu0 %1080
        %vm1082 = vcmask 900096
        %v1083 = vsel %vm1082, %v1069, %v1071
        %v1084 = vsel %vm1082, %v1071, %v1073
        %v1085 = vsel %vm1082, %v1073, %v1075
        %v1086 = vsel %vm1082, %v1075, %v1077
        %v1087 = vsel %vm1082, %v1077, %v1079
        %v1088 = vsel %vm1082, %v1079, %v1081
        %1096 = vrot.lane.b32.xlu0 %v922, 96
        %v1097 = vpop.permute.xlu0 %1096
        %1098 = vrot.lane.b32.xlu0 %v923, 96
        %v1099 = vpop.permute.xlu0 %1098
        %1100 = vrot.lane.b32.xlu0 %v924, 96
        %v1101 = vpop.permute.xlu0 %1100
        %1102 = vrot.lane.b32.xlu0 %v925, 96
        %v1103 = vpop.permute.xlu0 %1102
        %1104 = vrot.lane.b32.xlu0 %v926, 96
        %v1105 = vpop.permute.xlu0 %1104
        %1106 = vrot.lane.b32.xlu0 %v927, 96
        %v1107 = vpop.permute.xlu0 %1106
        %1108 = vrot.lane.b32.xlu0 %v928, 96
        %v1109 = vpop.permute.xlu0 %1108
        %vm1110 = vcmask 785408
        %v1111 = vsel %vm1110, %v1097, %v1099
        %v1112 = vsel %vm1110, %v1099, %v1101
        %v1113 = vsel %vm1110, %v1101, %v1103
        %v1114 = vsel %vm1110, %v1103, %v1105
        %v1115 = vsel %vm1110, %v1105, %v1107
        %v1116 = vsel %vm1110, %v1107, %v1109
        %1124 = vrot.lane.b32.xlu0 %v858, 95
        %v1125 = vpop.permute.xlu0 %1124
        %1126 = vrot.lane.b32.xlu0 %v859, 95
        %v1127 = vpop.permute.xlu0 %1126
        %1128 = vrot.lane.b32.xlu0 %v860, 95
        %v1129 = vpop.permute.xlu0 %1128
        %1130 = vrot.lane.b32.xlu0 %v861, 95
        %v1131 = vpop.permute.xlu0 %1130
        %1132 = vrot.lane.b32.xlu0 %v862, 95
        %v1133 = vpop.permute.xlu0 %1132
        %1134 = vrot.lane.b32.xlu0 %v863, 95
        %v1135 = vpop.permute.xlu0 %1134
        %1136 = vrot.lane.b32.xlu0 %v864, 95
        %v1137 = vpop.permute.xlu0 %1136
        %vm1138 = vcmask 777216
        %v1139 = vsel %vm1138, %v1125, %v1127
        %v1140 = vsel %vm1138, %v1127, %v1129
        %v1141 = vsel %vm1138, %v1129, %v1131
        %v1142 = vsel %vm1138, %v1131, %v1133
        %v1143 = vsel %vm1138, %v1133, %v1135
        %v1144 = vsel %vm1138, %v1135, %v1137
        %1152 = vrot.lane.b32.xlu0 %v954, 94
        %v1153 = vpop.permute.xlu0 %1152
        %1154 = vrot.lane.b32.xlu0 %v955, 94
        %v1155 = vpop.permute.xlu0 %1154
        %1156 = vrot.lane.b32.xlu0 %v956, 94
        %v1157 = vpop.permute.xlu0 %1156
        %1158 = vrot.lane.b32.xlu0 %v957, 94
        %v1159 = vpop.permute.xlu0 %1158
        %1160 = vrot.lane.b32.xlu0 %v958, 94
        %v1161 = vpop.permute.xlu0 %1160
        %1162 = vrot.lane.b32.xlu0 %v959, 94
        %v1163 = vpop.permute.xlu0 %1162
        %1164 = vrot.lane.b32.xlu0 %v960, 94
        %v1165 = vpop.permute.xlu0 %1164
        %vm1166 = vcmask 769024
        %v1167 = vsel %vm1166, %v1153, %v1155
        %v1168 = vsel %vm1166, %v1155, %v1157
        %v1169 = vsel %vm1166, %v1157, %v1159
        %v1170 = vsel %vm1166, %v1159, %v1161
        %v1171 = vsel %vm1166, %v1161, %v1163
        %v1172 = vsel %vm1166, %v1163, %v1165
        %v1173 = vld [vmem:[%s3] sm:$0xff]
        %v1174 = vld [vmem:[%s4] sm:$0xff]
        %1176 = vset.pattern.permute.xlu0 0
        %1177 = vperm.xlu0 %1176, %v1174
        %v1178 = vpop.permute.xlu0 %1177
        %v1181 = vunpack.c.l.b16 %v1173
        %v1182 = vunpack.c.h.b16 %v1173
        %v1183 = vpack.c.b16 %v1181, %v1181
        %v1184 = vpack.c.b16 %v1182, %v1182
        %1193 = vrot.lane.b32.xlu0 %v745, 17
        %v1194 = vpop.permute.xlu0 %1193
        %1195 = vrot.lane.b32.xlu0 %v746, 17
        %v1196 = vpop.permute.xlu0 %1195
        %1197 = vrot.lane.b32.xlu0 %v747, 17
        %v1198 = vpop.permute.xlu0 %1197
        %1199 = vrot.lane.b32.xlu0 %v748, 17
        %v1200 = vpop.permute.xlu0 %1199
        %1201 = vrot.lane.b32.xlu0 %v749, 17
        %v1202 = vpop.permute.xlu0 %1201
        %1203 = vrot.lane.b32.xlu0 %v750, 17
        %v1204 = vpop.permute.xlu0 %1203
        %1205 = vrot.lane.b32.xlu0 %v751, 17
        %v1206 = vpop.permute.xlu0 %1205
        %1207 = vrot.lane.b32.xlu0 %v982, 17
        %v1208 = vpop.permute.xlu0 %1207
        %1209 = vrot.lane.b32.xlu0 %v983, 17
        %v1210 = vpop.permute.xlu0 %1209
        %1211 = vrot.lane.b32.xlu0 %v984, 17
        %v1212 = vpop.permute.xlu0 %1211
        %1213 = vrot.lane.b32.xlu0 %v985, 17
        %v1214 = vpop.permute.xlu0 %1213
        %1215 = vrot.lane.b32.xlu0 %v986, 17
        %v1216 = vpop.permute.xlu0 %1215
        %1217 = vrot.lane.b32.xlu0 %v987, 17
        %v1218 = vpop.permute.xlu0 %1217
        %1219 = vrot.lane.b32.xlu0 %v981, 17
        %v1220 = vpop.permute.xlu0 %1219
        %1221 = vrot.lane.b32.xlu0 %v1010, 17
        %v1222 = vpop.permute.xlu0 %1221
        %1223 = vrot.lane.b32.xlu0 %v1011, 17
        %v1224 = vpop.permute.xlu0 %1223
        %1225 = vrot.lane.b32.xlu0 %v1012, 17
        %v1226 = vpop.permute.xlu0 %1225
        %1227 = vrot.lane.b32.xlu0 %v1013, 17
        %v1228 = vpop.permute.xlu0 %1227
        %1229 = vrot.lane.b32.xlu0 %v1014, 17
        %v1230 = vpop.permute.xlu0 %1229
        %1231 = vrot.lane.b32.xlu0 %v1015, 17
        %v1232 = vpop.permute.xlu0 %1231
        %1233 = vrot.lane.b32.xlu0 %v1008, 17
        %v1234 = vpop.permute.xlu0 %1233
        %1235 = vrot.lane.b32.xlu0 %v1038, 17
        %v1236 = vpop.permute.xlu0 %1235
        %1237 = vrot.lane.b32.xlu0 %v1039, 17
        %v1238 = vpop.permute.xlu0 %1237
        %1239 = vrot.lane.b32.xlu0 %v1040, 17
        %v1240 = vpop.permute.xlu0 %1239
        %1241 = vrot.lane.b32.xlu0 %v1041, 17
        %v1242 = vpop.permute.xlu0 %1241
        %1243 = vrot.lane.b32.xlu0 %v1042, 17
        %v1244 = vpop.permute.xlu0 %1243
        %1245 = vrot.lane.b32.xlu0 %v1043, 17
        %v1246 = vpop.permute.xlu0 %1245
        %1247 = vrot.lane.b32.xlu0 %v1036, 17
        %v1248 = vpop.permute.xlu0 %1247
        %1249 = vrot.lane.b32.xlu0 %v1045, 17
        %v1250 = vpop.permute.xlu0 %1249
        %1251 = vrot.lane.b32.xlu0 %v1056, 17
        %v1252 = vpop.permute.xlu0 %1251
        %1253 = vrot.lane.b32.xlu0 %v1057, 17
        %v1254 = vpop.permute.xlu0 %1253
        %1255 = vrot.lane.b32.xlu0 %v1058, 17
        %v1256 = vpop.permute.xlu0 %1255
        %1257 = vrot.lane.b32.xlu0 %v1059, 17
        %v1258 = vpop.permute.xlu0 %1257
        %1259 = vrot.lane.b32.xlu0 %v1060, 17
        %v1260 = vpop.permute.xlu0 %1259
        %1261 = vrot.lane.b32.xlu0 %v1055, 17
        %v1262 = vpop.permute.xlu0 %1261
        %1263 = vrot.lane.b32.xlu0 %v1069, 17
        %v1264 = vpop.permute.xlu0 %1263
        %1265 = vrot.lane.b32.xlu0 %v1083, 17
        %v1266 = vpop.permute.xlu0 %1265
        %1267 = vrot.lane.b32.xlu0 %v1084, 17
        %v1268 = vpop.permute.xlu0 %1267
        %1269 = vrot.lane.b32.xlu0 %v1085, 17
        %v1270 = vpop.permute.xlu0 %1269
        %1271 = vrot.lane.b32.xlu0 %v1086, 17
        %v1272 = vpop.permute.xlu0 %1271
        %1273 = vrot.lane.b32.xlu0 %v1087, 17
        %v1274 = vpop.permute.xlu0 %1273
        %1275 = vrot.lane.b32.xlu0 %v1088, 17
        %v1276 = vpop.permute.xlu0 %1275
        %1277 = vrot.lane.b32.xlu0 %v1097, 17
        %v1278 = vpop.permute.xlu0 %1277
        %1279 = vrot.lane.b32.xlu0 %v1111, 17
        %v1280 = vpop.permute.xlu0 %1279
        %1281 = vrot.lane.b32.xlu0 %v1112, 17
        %v1282 = vpop.permute.xlu0 %1281
        %1283 = vrot.lane.b32.xlu0 %v1113, 17
        %v1284 = vpop.permute.xlu0 %1283
        %1285 = vrot.lane.b32.xlu0 %v1114, 17
        %v1286 = vpop.permute.xlu0 %1285
        %1287 = vrot.lane.b32.xlu0 %v1115, 17
        %v1288 = vpop.permute.xlu0 %1287
        %1289 = vrot.lane.b32.xlu0 %v1116, 17
        %v1290 = vpop.permute.xlu0 %1289
        %1291 = vrot.lane.b32.xlu0 %v1125, 17
        %v1292 = vpop.permute.xlu0 %1291
        %1293 = vrot.lane.b32.xlu0 %v1139, 17
        %v1294 = vpop.permute.xlu0 %1293
        %1295 = vrot.lane.b32.xlu0 %v1140, 17
        %v1296 = vpop.permute.xlu0 %1295
        %1297 = vrot.lane.b32.xlu0 %v1141, 17
        %v1298 = vpop.permute.xlu0 %1297
        %1299 = vrot.lane.b32.xlu0 %v1142, 17
        %v1300 = vpop.permute.xlu0 %1299
        %1301 = vrot.lane.b32.xlu0 %v1143, 17
        %v1302 = vpop.permute.xlu0 %1301
        %1303 = vrot.lane.b32.xlu0 %v1144, 17
        %v1304 = vpop.permute.xlu0 %1303
        %1305 = vrot.lane.b32.xlu0 %v1153, 17
        %v1306 = vpop.permute.xlu0 %1305
        %1307 = vrot.lane.b32.xlu0 %v1167, 17
        %v1308 = vpop.permute.xlu0 %1307
        %1309 = vrot.lane.b32.xlu0 %v1168, 17
        %v1310 = vpop.permute.xlu0 %1309
        %1311 = vrot.lane.b32.xlu0 %v1169, 17
        %v1312 = vpop.permute.xlu0 %1311
        %1313 = vrot.lane.b32.xlu0 %v1170, 17
        %v1314 = vpop.permute.xlu0 %1313
        %1315 = vrot.lane.b32.xlu0 %v1171, 17
        %v1316 = vpop.permute.xlu0 %1315
        %1317 = vrot.lane.b32.xlu0 %v1172, 17
        %v1318 = vpop.permute.xlu0 %1317
        %v1319 = vsel %vm941, %v1194, %v1196
        %v1320 = vsel %vm941, %v1196, %v1198
        %v1321 = vsel %vm941, %v1198, %v1200
        %v1322 = vsel %vm941, %v1200, %v1202
        %v1323 = vsel %vm941, %v1202, %v1204
        %v1324 = vsel %vm941, %v1204, %v1206
        %v1325 = vsel %vm941, %v1208, %v1210
        %v1326 = vsel %vm941, %v1210, %v1212
        %v1327 = vsel %vm941, %v1212, %v1214
        %v1328 = vsel %vm941, %v1214, %v1216
        %v1329 = vsel %vm941, %v1216, %v1218
        %v1330 = vsel %vm941, %v1218, %v1220
        %v1331 = vsel %vm941, %v1222, %v1224
        %v1332 = vsel %vm941, %v1224, %v1226
        %v1333 = vsel %vm941, %v1226, %v1228
        %v1334 = vsel %vm941, %v1228, %v1230
        %v1335 = vsel %vm941, %v1230, %v1232
        %v1336 = vsel %vm941, %v1232, %v1234
        %v1337 = vsel %vm941, %v1236, %v1238
        %v1338 = vsel %vm941, %v1238, %v1240
        %v1339 = vsel %vm941, %v1240, %v1242
        %v1340 = vsel %vm941, %v1242, %v1244
        %v1341 = vsel %vm941, %v1244, %v1246
        %v1342 = vsel %vm941, %v1246, %v1248
        %v1343 = vsel %vm941, %v1250, %v1252
        %v1344 = vsel %vm941, %v1252, %v1254
        %v1345 = vsel %vm941, %v1254, %v1256
        %v1346 = vsel %vm941, %v1256, %v1258
        %v1347 = vsel %vm941, %v1258, %v1260
        %v1348 = vsel %vm941, %v1260, %v1262
        %v1349 = vsel %vm941, %v1264, %v1266
        %v1350 = vsel %vm941, %v1266, %v1268
        %v1351 = vsel %vm941, %v1268, %v1270
        %v1352 = vsel %vm941, %v1270, %v1272
        %v1353 = vsel %vm941, %v1272, %v1274
        %v1354 = vsel %vm941, %v1274, %v1276
        %v1355 = vsel %vm941, %v1278, %v1280
        %v1356 = vsel %vm941, %v1280, %v1282
        %v1357 = vsel %vm941, %v1282, %v1284
        %v1358 = vsel %vm941, %v1284, %v1286
        %v1359 = vsel %vm941, %v1286, %v1288
        %v1360 = vsel %vm941, %v1288, %v1290
        %v1361 = vsel %vm941, %v1292, %v1294
        %v1362 = vsel %vm941, %v1294, %v1296
        %v1363 = vsel %vm941, %v1296, %v1298
        %v1364 = vsel %vm941, %v1298, %v1300
        %v1365 = vsel %vm941, %v1300, %v1302
        %v1366 = vsel %vm941, %v1302, %v1304
        %v1367 = vsel %vm941, %v1306, %v1308
        %v1368 = vsel %vm941, %v1308, %v1310
        %v1369 = vsel %vm941, %v1310, %v1312
        %v1370 = vsel %vm941, %v1312, %v1314
        %v1371 = vsel %vm941, %v1314, %v1316
        %v1372 = vsel %vm941, %v1316, %v1318
        %vm1427 = vcmask 130048
        %v1429 = vsel %vm1427, %v1184, 0
        %1431 = vmatprep.subr.bf16.mxu0 %v1320
        %1432 = vmatpush1.bf16.msra.mxu0 %v1319
        %1433 = vmatprep.subr.bf16.mxu0 %v1326
        %1434 = vmatpush1.bf16.msra.mxu0 %v1325
        %1435 = vmatprep.subr.bf16.mxu0 %v1332
        %1436 = vmatpush1.bf16.msra.mxu0 %v1331
        %1437 = vmatprep.subr.bf16.mxu0 %v1338
        %1438 = vmatpush1.bf16.msra.mxu0 %v1337
        %1439 = vmatprep.subr.bf16.mxu0 %v1344
        %1440 = vmatpush1.bf16.msra.mxu0 %v1343
        %1441 = vmatprep.subr.bf16.mxu0 %v1350
        %1442 = vmatpush1.bf16.msra.mxu0 %v1349
        %1443 = vmatprep.subr.bf16.mxu0 %v1356
        %1444 = vmatpush1.bf16.msra.mxu0 %v1355
        %1445 = vmatprep.subr.bf16.mxu0 %v1362
        %1446 = vmatpush1.bf16.msra.mxu0 %v1361
        %1447 = vmatprep.subr.bf16.mxu0 %v1368
        %1448 = vmatpush1.bf16.msra.mxu0 %v1367
        %1449 = vmatprep.subr.bf16.mxu0 0
        %1450 = vmatpush1.bf16.msra.mxu0 0
        %1451 = vmatprep.subr.bf16.mxu0 0
        %1452 = vmatpush1.bf16.msra.mxu0 0
        %1453 = vmatprep.subr.bf16.mxu0 0
        %1454 = vmatpush1.bf16.msra.mxu0 0
        %1455 = vmatprep.subr.bf16.mxu0 0
        %1456 = vmatpush1.bf16.msra.mxu0 0
        %1457 = vmatprep.subr.bf16.mxu0 0
        %1458 = vmatpush1.bf16.msra.mxu0 0
        %1459 = vmatprep.subr.bf16.mxu0 0
        %1460 = vmatpush1.bf16.msra.mxu0 0
        %1461 = vmatprep.subr.bf16.mxu0 0
        %1462 = vmatpush1.bf16.msra.mxu0 0
        %1463 = vmatprep.mubr.bf16.mxu0 %v1429
        %1464 = vmatmul.mubr.bf16.gmra.mrb[0].mxu0 %v1183
        %v1465 = vpop.f32.mrb[0].mxu0
        %v1466 = vadd.f32 %v1178, %v1465
        %v1467 = vpop.f32.mrb[0].mxu0
        %v1468 = vadd.f32 %v1178, %v1467
        %v1469 = vpop.f32.mrb[0].mxu0
        %v1470 = vpop.f32.mrb[0].mxu0
        %1471 = vdwg.mxu0
        %1472 = vmatprep.subr.bf16.mxu0 %v1322
        %1473 = vmatpush1.bf16.msra.mxu0 %v1321
        %1474 = vmatprep.subr.bf16.mxu0 %v1328
        %1475 = vmatpush1.bf16.msra.mxu0 %v1327
        %1476 = vmatprep.subr.bf16.mxu0 %v1334
        %1477 = vmatpush1.bf16.msra.mxu0 %v1333
        %1478 = vmatprep.subr.bf16.mxu0 %v1340
        %1479 = vmatpush1.bf16.msra.mxu0 %v1339
        %1480 = vmatprep.subr.bf16.mxu0 %v1346
        %1481 = vmatpush1.bf16.msra.mxu0 %v1345
        %1482 = vmatprep.subr.bf16.mxu0 %v1352
        %1483 = vmatpush1.bf16.msra.mxu0 %v1351
        %1484 = vmatprep.subr.bf16.mxu0 %v1358
        %1485 = vmatpush1.bf16.msra.mxu0 %v1357
        %1486 = vmatprep.subr.bf16.mxu0 %v1364
        %1487 = vmatpush1.bf16.msra.mxu0 %v1363
        %1488 = vmatprep.subr.bf16.mxu0 %v1370
        %1489 = vmatpush1.bf16.msra.mxu0 %v1369
        %1490 = vmatprep.subr.bf16.mxu0 0
        %1491 = vmatpush1.bf16.msra.mxu0 0
        %1492 = vmatprep.subr.bf16.mxu0 0
        %1493 = vmatpush1.bf16.msra.mxu0 0
        %1494 = vmatprep.subr.bf16.mxu0 0
        %1495 = vmatpush1.bf16.msra.mxu0 0
        %1496 = vmatprep.subr.bf16.mxu0 0
        %1497 = vmatpush1.bf16.msra.mxu0 0
        %1498 = vmatprep.subr.bf16.mxu0 0
        %1499 = vmatpush1.bf16.msra.mxu0 0
        %1500 = vmatprep.subr.bf16.mxu0 0
        %1501 = vmatpush1.bf16.msra.mxu0 0
        %1502 = vmatprep.subr.bf16.mxu0 0
        %1503 = vmatpush1.bf16.msra.mxu0 0
        %1504 = vmatprep.mubr.bf16.mxu0 %v1429
        %1505 = vmatmul.mubr.bf16.gmra.mrb[0].mxu0 %v1183
        %v1506 = vpop.f32.mrb[0].mxu0
        %v1507 = vpop.f32.mrb[0].mxu0
        %v1508 = vadd.f32 %v1178, %v1507
        %v1509 = vpop.f32.mrb[0].mxu0
        %v1510 = vpop.f32.mrb[0].mxu0
        %1511 = vdwg.mxu0
        %1512 = vmatprep.subr.bf16.mxu0 %v1324
        %1513 = vmatpush1.bf16.msra.mxu0 %v1323
        %1514 = vmatprep.subr.bf16.mxu0 %v1330
        %1515 = vmatpush1.bf16.msra.mxu0 %v1329
        %1516 = vmatprep.subr.bf16.mxu0 %v1336
        %1517 = vmatpush1.bf16.msra.mxu0 %v1335
        %1518 = vmatprep.subr.bf16.mxu0 %v1342
        %1519 = vmatpush1.bf16.msra.mxu0 %v1341
        %1520 = vmatprep.subr.bf16.mxu0 %v1348
        %1521 = vmatpush1.bf16.msra.mxu0 %v1347
        %1522 = vmatprep.subr.bf16.mxu0 %v1354
        %1523 = vmatpush1.bf16.msra.mxu0 %v1353
        %1524 = vmatprep.subr.bf16.mxu0 %v1360
        %1525 = vmatpush1.bf16.msra.mxu0 %v1359
        %1526 = vmatprep.subr.bf16.mxu0 %v1366
        %1527 = vmatpush1.bf16.msra.mxu0 %v1365
        %1528 = vmatprep.subr.bf16.mxu0 %v1372
        %1529 = vmatpush1.bf16.msra.mxu0 %v1371
        %1530 = vmatprep.subr.bf16.mxu0 0
        %1531 = vmatpush1.bf16.msra.mxu0 0
        %1532 = vmatprep.subr.bf16.mxu0 0
        %1533 = vmatpush1.bf16.msra.mxu0 0
        %1534 = vmatprep.subr.bf16.mxu0 0
        %1535 = vmatpush1.bf16.msra.mxu0 0
        %1536 = vmatprep.subr.bf16.mxu0 0
        %1537 = vmatpush1.bf16.msra.mxu0 0
        %1538 = vmatprep.subr.bf16.mxu0 0
        %1539 = vmatpush1.bf16.msra.mxu0 0
        %1540 = vmatprep.subr.bf16.mxu0 0
        %1541 = vmatpush1.bf16.msra.mxu0 0
        %1542 = vmatprep.subr.bf16.mxu0 0
        %1543 = vmatpush1.bf16.msra.mxu0 0
        %1544 = vmatprep.mubr.bf16.mxu0 %v1429
        %1545 = vmatmul.mubr.bf16.gmra.mrb[0].mxu0 %v1183
        %v1546 = vpop.f32.mrb[0].mxu0
        %v1547 = vadd.f32 %v1178, %v1546
        %v1548 = vpop.f32.mrb[0].mxu0
        %v1549 = vpop.f32.mrb[0].mxu0
        %v1550 = vpop.f32.mrb[0].mxu0
        %1551 = vdwg.mxu0
        %vm1552 = vcmp.gt.f32.partialorder %v1466, 0.0
        %vm1553 = vcmp.gt.f32.partialorder %v1468, 0.0
        %vm1554 = vcmp.gt.f32.partialorder %v1508, 0.0
        %vm1555 = vcmp.gt.f32.partialorder %v1547, 0.0
        %v1556 = vmul.f32 %v1466, 0.01
        %v1557 = vmul.f32 %v1468, 0.01
        %v1558 = vmul.f32 %v1508, 0.01
        %v1559 = vmul.f32 %v1547, 0.01
        %v1560 = vsel %vm1552, %v1466, %v1556
        %v1561 = vsel %vm1553, %v1468, %v1557
        %v1562 = vsel %vm1554, %v1508, %v1558
        %v1563 = vsel %vm1555, %v1547, %v1559
        %v1564 = vpack.c.bf16 %v1560, %v1560
        %v1565 = vpack.c.bf16 %v1561, %v1561
        %v1568 = vunpack.c.l.b16 %v1564
        %v1569 = vunpack.c.l.b16 %v1565
        %v1570 = vpack.c.b16 %v1569, %v1568
        %1572 = vst [vmem:[#allocation3 + $0x4] sm:$0xff] %v1570
        %1573 = vst [vmem:[#allocation3 + $0xc] sm:$0xf] 0
        %v1574 = vpack.c.bf16 %v1562, %v1562
        %v1575 = vpack.c.bf16 %v1563, %v1563
        %v1578 = vunpack.c.l.b16 %v1574
        %v1579 = vunpack.c.l.b16 %v1575
        %v1580 = vpack.c.b16 %v1579, %v1578
        %1582 = vst [vmem:[#allocation3 + $0x10] sm:$0xff] %v1580
        %1583 = vst [vmem:[#allocation3 + $0x18] sm:$0xf] 0
        %v1584 = vld [vmem:[#allocation3] sm:$0xff]
        %v1585 = vld [vmem:[#allocation3 + $0x8] sm:$0xff]
        %v1586 = vld [vmem:[#allocation3 + $0x10] sm:$0xff]
        %v1587 = vld [vmem:[#allocation3 + $0x18] sm:$0xf]
        %1588 = vrot.lane.b32.xlu0 %v693, 111
        %v1589 = vpop.permute.xlu0 %1588
        %1590 = vrot.lane.b32.xlu0 %v694, 111
        %v1591 = vpop.permute.xlu0 %1590
        %1592 = vrot.lane.b32.xlu0 %v695, 111
        %v1593 = vpop.permute.xlu0 %1592
        %v1594 = vrot.slane %v1589, 4
        %v1595 = vrot.slane %v1591, 4
        %v1596 = vrot.slane %v1593, 4
        %v1597 = vsel %vm732, %v1594, %v1589
        %vm1598 = vcmask 1043456
        %v1599 = vsel %vm1598, %v1594, %v1595
        %v1600 = vsel %vm732, %v1599, %v1591
        %v1601 = vsel %vm1598, %v1595, %v1596
        %v1602 = vsel %vm732, %v1601, %v1593
        %vm1603 = vcmp.ne.s16.totalorder %v1597, 0
        %vm1604 = vcmp.ne.s16.totalorder %v1600, 0
        %vm1605 = vcmp.ne.s16.totalorder %v1602, 0
        %vm1606 = vcmp.ne.s16.totalorder %v1596, 0
        %v1607 = vsel %vm1603, %v1584, 0
        %v1608 = vsel %vm1604, %v1585, 0
        %v1609 = vsel %vm1605, %v1586, 0
        %v1610 = vsel %vm1606, %v1587, 0
        %1611 = vrot.lane.b32.xlu0 %v767, 113
        %v1612 = vpop.permute.xlu0 %1611
        %1613 = vrot.lane.b32.xlu0 %v768, 113
        %v1614 = vpop.permute.xlu0 %1613
        %1615 = vrot.lane.b32.xlu0 %v769, 113
        %v1616 = vpop.permute.xlu0 %1615
        %v1617 = vrot.slane %v1612, 4
        %v1618 = vrot.slane %v1614, 4
        %v1619 = vrot.slane %v1616, 4
        %v1620 = vsel %vm806, %v1617, %v1612
        %v1621 = vsel %vm1598, %v1617, %v1618
        %v1622 = vsel %vm806, %v1621, %v1614
        %v1623 = vsel %vm1598, %v1618, %v1619
        %v1624 = vsel %vm806, %v1623, %v1616
        %vm1625 = vcmp.ne.s16.totalorder %v1620, 0
        %vm1626 = vcmp.ne.s16.totalorder %v1622, 0
        %vm1627 = vcmp.ne.s16.totalorder %v1624, 0
        %vm1628 = vcmp.ne.s16.totalorder %v1619, 0
        %v1629 = vsel %vm1625, %v1584, 0
        %v1630 = vsel %vm1626, %v1585, 0
        %v1631 = vsel %vm1627, %v1586, 0
        %v1632 = vsel %vm1628, %v1587, 0
        %1633 = vrot.lane.b32.xlu0 %v693, 127
        %v1634 = vpop.permute.xlu0 %1633
        %1635 = vrot.lane.b32.xlu0 %v694, 127
        %v1636 = vpop.permute.xlu0 %1635
        %1637 = vrot.lane.b32.xlu0 %v695, 127
        %v1638 = vpop.permute.xlu0 %1637
        %v1639 = vrot.slane %v1634, 4
        %v1640 = vrot.slane %v1636, 4
        %v1641 = vrot.slane %v1638, 4
        %v1642 = vsel %vm838, %v1639, %v1634
        %v1643 = vsel %vm1598, %v1639, %v1640
        %v1644 = vsel %vm838, %v1643, %v1636
        %v1645 = vsel %vm1598, %v1640, %v1641
        %v1646 = vsel %vm838, %v1645, %v1638
        %vm1647 = vcmp.ne.s16.totalorder %v1642, 0
        %vm1648 = vcmp.ne.s16.totalorder %v1644, 0
        %vm1649 = vcmp.ne.s16.totalorder %v1646, 0
        %vm1650 = vcmp.ne.s16.totalorder %v1641, 0
        %v1651 = vsel %vm1647, %v1584, 0
        %v1652 = vsel %vm1648, %v1585, 0
        %v1653 = vsel %vm1649, %v1586, 0
        %v1654 = vsel %vm1650, %v1587, 0
        %v1655 = vld [vmem:[#allocation3 + $0x4] sm:$0xff]
        %v1656 = vld [vmem:[#allocation3 + $0xc] sm:$0xff]
        %v1657 = vld [vmem:[#allocation3 + $0x14] sm:$0xff]
        %v1658 = vld [vmem:[#allocation3 + $0x4] sm:$0xff]
        %v1659 = vld [vmem:[#allocation3 + $0xc] sm:$0xff]
        %v1660 = vld [vmem:[#allocation3 + $0x14] sm:$0xff]
        %v1661 = vld [vmem:[#allocation3 + $0x1c] sm:$0xf]
        %1662 = vrot.lane.b32.xlu0 %v767, 1
        %v1663 = vpop.permute.xlu0 %1662
        %1664 = vrot.lane.b32.xlu0 %v768, 1
        %v1665 = vpop.permute.xlu0 %1664
        %1666 = vrot.lane.b32.xlu0 %v769, 1
        %v1667 = vpop.permute.xlu0 %1666
        %v1668 = vrot.slane %v1663, 4
        %v1669 = vrot.slane %v1665, 4
        %v1670 = vrot.slane %v1667, 4
        %v1671 = vsel %vm877, %v1668, %v1663
        %v1672 = vsel %vm1598, %v1668, %v1669
        %v1673 = vsel %vm877, %v1672, %v1665
        %v1674 = vsel %vm1598, %v1669, %v1670
        %v1675 = vsel %vm877, %v1674, %v1667
        %vm1676 = vcmp.ne.s16.totalorder %v1671, 0
        %vm1677 = vcmp.ne.s16.totalorder %v1673, 0
        %vm1678 = vcmp.ne.s16.totalorder %v1675, 0
        %vm1679 = vcmp.ne.s16.totalorder %v1670, 0
        %v1680 = vsel %vm1676, %v1658, 0
        %v1681 = vsel %vm1677, %v1659, 0
        %v1682 = vsel %vm1678, %v1660, 0
        %v1683 = vsel %vm1679, %v1661, 0
        %1684 = vrot.lane.b32.xlu0 %v693, 15
        %v1685 = vpop.permute.xlu0 %1684
        %1686 = vrot.lane.b32.xlu0 %v694, 15
        %v1687 = vpop.permute.xlu0 %1686
        %1688 = vrot.lane.b32.xlu0 %v695, 15
        %v1689 = vpop.permute.xlu0 %1688
        %v1690 = vrot.slane %v1685, 4
        %v1691 = vrot.slane %v1687, 4
        %v1692 = vrot.slane %v1689, 4
        %v1693 = vsel %vm909, %v1690, %v1685
        %v1694 = vsel %vm1598, %v1690, %v1691
        %v1695 = vsel %vm909, %v1694, %v1687
        %v1696 = vsel %vm1598, %v1691, %v1692
        %v1697 = vsel %vm909, %v1696, %v1689
        %vm1698 = vcmp.ne.s16.totalorder %v1693, 0
        %vm1699 = vcmp.ne.s16.totalorder %v1695, 0
        %vm1700 = vcmp.ne.s16.totalorder %v1697, 0
        %vm1701 = vcmp.ne.s16.totalorder %v1692, 0
        %v1702 = vsel %vm1698, %v1658, 0
        %v1703 = vsel %vm1699, %v1659, 0
        %v1704 = vsel %vm1700, %v1660, 0
        %v1705 = vsel %vm1701, %v1661, 0
        %1706 = vrot.lane.b32.xlu0 %v767, 17
        %v1707 = vpop.permute.xlu0 %1706
        %1708 = vrot.lane.b32.xlu0 %v768, 17
        %v1709 = vpop.permute.xlu0 %1708
        %1710 = vrot.lane.b32.xlu0 %v769, 17
        %v1711 = vpop.permute.xlu0 %1710
        %v1712 = vrot.slane %v1707, 4
        %v1713 = vrot.slane %v1709, 4
        %v1714 = vrot.slane %v1711, 4
        %v1715 = vsel %vm941, %v1712, %v1707
        %v1716 = vsel %vm1598, %v1712, %v1713
        %v1717 = vsel %vm941, %v1716, %v1709
        %v1718 = vsel %vm1598, %v1713, %v1714
        %v1719 = vsel %vm941, %v1718, %v1711
        %vm1720 = vcmp.ne.s16.totalorder %v1715, 0
        %vm1721 = vcmp.ne.s16.totalorder %v1717, 0
        %vm1722 = vcmp.ne.s16.totalorder %v1719, 0
        %vm1723 = vcmp.ne.s16.totalorder %v1714, 0
        %v1724 = vsel %vm1720, %v1658, 0
        %v1725 = vsel %vm1721, %v1659, 0
        %v1726 = vsel %vm1722, %v1660, 0
        %v1727 = vsel %vm1723, %v1661, 0
        %v1732 = vunpack.c.l.b16 %v1607
        %v1733 = vunpack.c.h.b16 %v1607
        %v1734 = vunpack.c.l.b16 %v1608
        %v1735 = vunpack.c.h.b16 %v1608
        %v1736 = vunpack.c.l.b16 %v1609
        %v1737 = vunpack.c.h.b16 %v1609
        %v1738 = vunpack.c.l.b16 %v1610
        %v1739 = vpack.c.b16 %v1732, %v1732
        %v1740 = vpack.c.b16 %v1733, %v1733
        %v1741 = vpack.c.b16 %v1734, %v1734
        %v1742 = vpack.c.b16 %v1735, %v1735
        %v1743 = vpack.c.b16 %v1736, %v1736
        %v1744 = vpack.c.b16 %v1737, %v1737
        %v1745 = vpack.c.b16 %v1738, %v1738
        %v1750 = vunpack.c.l.b16 %v1584
        %v1751 = vunpack.c.h.b16 %v1584
        %v1752 = vunpack.c.l.b16 %v1585
        %v1753 = vunpack.c.h.b16 %v1585
        %v1754 = vunpack.c.l.b16 %v1586
        %v1755 = vunpack.c.h.b16 %v1586
        %v1756 = vunpack.c.l.b16 %v1587
        %v1757 = vpack.c.b16 %v1750, %v1750
        %v1758 = vpack.c.b16 %v1751, %v1751
        %v1759 = vpack.c.b16 %v1752, %v1752
        %v1760 = vpack.c.b16 %v1753, %v1753
        %v1761 = vpack.c.b16 %v1754, %v1754
        %v1762 = vpack.c.b16 %v1755, %v1755
        %v1763 = vpack.c.b16 %v1756, %v1756
        %1764 = vrot.lane.b32.xlu0 %v1757, 127
        %v1765 = vpop.permute.xlu0 %1764
        %1766 = vrot.lane.b32.xlu0 %v1758, 127
        %v1767 = vpop.permute.xlu0 %1766
        %1768 = vrot.lane.b32.xlu0 %v1759, 127
        %v1769 = vpop.permute.xlu0 %1768
        %1770 = vrot.lane.b32.xlu0 %v1760, 127
        %v1771 = vpop.permute.xlu0 %1770
        %1772 = vrot.lane.b32.xlu0 %v1761, 127
        %v1773 = vpop.permute.xlu0 %1772
        %1774 = vrot.lane.b32.xlu0 %v1762, 127
        %v1775 = vpop.permute.xlu0 %1774
        %1776 = vrot.lane.b32.xlu0 %v1763, 127
        %v1777 = vpop.permute.xlu0 %1776
        %v1778 = vsel %vm838, %v1765, %v1767
        %v1779 = vsel %vm838, %v1767, %v1769
        %v1780 = vsel %vm838, %v1769, %v1771
        %v1781 = vsel %vm838, %v1771, %v1773
        %v1782 = vsel %vm838, %v1773, %v1775
        %v1783 = vsel %vm838, %v1775, %v1777
        %v1788 = vunpack.c.l.b16 %v1629
        %v1789 = vunpack.c.h.b16 %v1629
        %v1790 = vunpack.c.l.b16 %v1630
        %v1791 = vunpack.c.h.b16 %v1630
        %v1792 = vunpack.c.l.b16 %v1631
        %v1793 = vunpack.c.h.b16 %v1631
        %v1794 = vunpack.c.l.b16 %v1632
        %v1795 = vpack.c.b16 %v1788, %v1788
        %v1796 = vpack.c.b16 %v1789, %v1789
        %v1797 = vpack.c.b16 %v1790, %v1790
        %v1798 = vpack.c.b16 %v1791, %v1791
        %v1799 = vpack.c.b16 %v1792, %v1792
        %v1800 = vpack.c.b16 %v1793, %v1793
        %v1801 = vpack.c.b16 %v1794, %v1794
        %1802 = vrot.lane.b32.xlu0 %v1795, 126
        %v1803 = vpop.permute.xlu0 %1802
        %1804 = vrot.lane.b32.xlu0 %v1796, 126
        %v1805 = vpop.permute.xlu0 %1804
        %1806 = vrot.lane.b32.xlu0 %v1797, 126
        %v1807 = vpop.permute.xlu0 %1806
        %1808 = vrot.lane.b32.xlu0 %v1798, 126
        %v1809 = vpop.permute.xlu0 %1808
        %1810 = vrot.lane.b32.xlu0 %v1799, 126
        %v1811 = vpop.permute.xlu0 %1810
        %1812 = vrot.lane.b32.xlu0 %v1800, 126
        %v1813 = vpop.permute.xlu0 %1812
        %1814 = vrot.lane.b32.xlu0 %v1801, 126
        %v1815 = vpop.permute.xlu0 %1814
        %v1816 = vsel %vm1009, %v1803, %v1805
        %v1817 = vsel %vm1009, %v1805, %v1807
        %v1818 = vsel %vm1009, %v1807, %v1809
        %v1819 = vsel %vm1009, %v1809, %v1811
        %v1820 = vsel %vm1009, %v1811, %v1813
        %v1821 = vsel %vm1009, %v1813, %v1815
        %v1826 = vunpack.c.l.b16 %v1651
        %v1827 = vunpack.c.h.b16 %v1651
        %v1828 = vunpack.c.l.b16 %v1652
        %v1829 = vunpack.c.h.b16 %v1652
        %v1830 = vunpack.c.l.b16 %v1653
        %v1831 = vunpack.c.h.b16 %v1653
        %v1832 = vunpack.c.l.b16 %v1654
        %v1833 = vpack.c.b16 %v1826, %v1826
        %v1834 = vpack.c.b16 %v1827, %v1827
        %v1835 = vpack.c.b16 %v1828, %v1828
        %v1836 = vpack.c.b16 %v1829, %v1829
        %v1837 = vpack.c.b16 %v1830, %v1830
        %v1838 = vpack.c.b16 %v1831, %v1831
        %v1839 = vpack.c.b16 %v1832, %v1832
        %1840 = vrot.lane.b32.xlu0 %v1833, 112
        %v1841 = vpop.permute.xlu0 %1840
        %1842 = vrot.lane.b32.xlu0 %v1834, 112
        %v1843 = vpop.permute.xlu0 %1842
        %1844 = vrot.lane.b32.xlu0 %v1835, 112
        %v1845 = vpop.permute.xlu0 %1844
        %1846 = vrot.lane.b32.xlu0 %v1836, 112
        %v1847 = vpop.permute.xlu0 %1846
        %1848 = vrot.lane.b32.xlu0 %v1837, 112
        %v1849 = vpop.permute.xlu0 %1848
        %1850 = vrot.lane.b32.xlu0 %v1838, 112
        %v1851 = vpop.permute.xlu0 %1850
        %1852 = vrot.lane.b32.xlu0 %v1839, 112
        %v1853 = vpop.permute.xlu0 %1852
        %v1854 = vsel %vm1037, %v1841, %v1843
        %v1855 = vsel %vm1037, %v1843, %v1845
        %v1856 = vsel %vm1037, %v1845, %v1847
        %v1857 = vsel %vm1037, %v1847, %v1849
        %v1858 = vsel %vm1037, %v1849, %v1851
        %v1859 = vsel %vm1037, %v1851, %v1853
        %v1863 = vunpack.c.l.b16 %v1655
        %v1864 = vunpack.c.h.b16 %v1655
        %v1865 = vunpack.c.l.b16 %v1656
        %v1866 = vunpack.c.h.b16 %v1656
        %v1867 = vunpack.c.l.b16 %v1657
        %v1868 = vunpack.c.h.b16 %v1657
        %v1869 = vpack.c.b16 %v1863, %v1863
        %v1870 = vpack.c.b16 %v1864, %v1864
        %v1871 = vpack.c.b16 %v1865, %v1865
        %v1872 = vpack.c.b16 %v1866, %v1866
        %v1873 = vpack.c.b16 %v1867, %v1867
        %v1874 = vpack.c.b16 %v1868, %v1868
        %1875 = vrot.lane.b32.xlu0 %v1869, 111
        %v1876 = vpop.permute.xlu0 %1875
        %1877 = vrot.lane.b32.xlu0 %v1870, 111
        %v1878 = vpop.permute.xlu0 %1877
        %1879 = vrot.lane.b32.xlu0 %v1871, 111
        %v1880 = vpop.permute.xlu0 %1879
        %1881 = vrot.lane.b32.xlu0 %v1872, 111
        %v1882 = vpop.permute.xlu0 %1881
        %1883 = vrot.lane.b32.xlu0 %v1873, 111
        %v1884 = vpop.permute.xlu0 %1883
        %1885 = vrot.lane.b32.xlu0 %v1874, 111
        %v1886 = vpop.permute.xlu0 %1885
        %v1887 = vsel %vm732, %v1876, %v1878
        %v1888 = vsel %vm732, %v1878, %v1880
        %v1889 = vsel %vm732, %v1880, %v1882
        %v1890 = vsel %vm732, %v1882, %v1884
        %v1891 = vsel %vm732, %v1884, %v1886
        %v1896 = vunpack.c.l.b16 %v1680
        %v1897 = vunpack.c.h.b16 %v1680
        %v1898 = vunpack.c.l.b16 %v1681
        %v1899 = vunpack.c.h.b16 %v1681
        %v1900 = vunpack.c.l.b16 %v1682
        %v1901 = vunpack.c.h.b16 %v1682
        %v1902 = vunpack.c.l.b16 %v1683
        %v1903 = vpack.c.b16 %v1896, %v1896
        %v1904 = vpack.c.b16 %v1897, %v1897
        %v1905 = vpack.c.b16 %v1898, %v1898
        %v1906 = vpack.c.b16 %v1899, %v1899
        %v1907 = vpack.c.b16 %v1900, %v1900
        %v1908 = vpack.c.b16 %v1901, %v1901
        %v1909 = vpack.c.b16 %v1902, %v1902
        %1910 = vrot.lane.b32.xlu0 %v1903, 110
        %v1911 = vpop.permute.xlu0 %1910
        %1912 = vrot.lane.b32.xlu0 %v1904, 110
        %v1913 = vpop.permute.xlu0 %1912
        %1914 = vrot.lane.b32.xlu0 %v1905, 110
        %v1915 = vpop.permute.xlu0 %1914
        %1916 = vrot.lane.b32.xlu0 %v1906, 110
        %v1917 = vpop.permute.xlu0 %1916
        %1918 = vrot.lane.b32.xlu0 %v1907, 110
        %v1919 = vpop.permute.xlu0 %1918
        %1920 = vrot.lane.b32.xlu0 %v1908, 110
        %v1921 = vpop.permute.xlu0 %1920
        %1922 = vrot.lane.b32.xlu0 %v1909, 110
        %v1923 = vpop.permute.xlu0 %1922
        %v1924 = vsel %vm1082, %v1911, %v1913
        %v1925 = vsel %vm1082, %v1913, %v1915
        %v1926 = vsel %vm1082, %v1915, %v1917
        %v1927 = vsel %vm1082, %v1917, %v1919
        %v1928 = vsel %vm1082, %v1919, %v1921
        %v1929 = vsel %vm1082, %v1921, %v1923
        %v1934 = vunpack.c.l.b16 %v1702
        %v1935 = vunpack.c.h.b16 %v1702
        %v1936 = vunpack.c.l.b16 %v1703
        %v1937 = vunpack.c.h.b16 %v1703
        %v1938 = vunpack.c.l.b16 %v1704
        %v1939 = vunpack.c.h.b16 %v1704
        %v1940 = vunpack.c.l.b16 %v1705
        %v1941 = vpack.c.b16 %v1934, %v1934
        %v1942 = vpack.c.b16 %v1935, %v1935
        %v1943 = vpack.c.b16 %v1936, %v1936
        %v1944 = vpack.c.b16 %v1937, %v1937
        %v1945 = vpack.c.b16 %v1938, %v1938
        %v1946 = vpack.c.b16 %v1939, %v1939
        %v1947 = vpack.c.b16 %v1940, %v1940
        %1948 = vrot.lane.b32.xlu0 %v1941, 96
        %v1949 = vpop.permute.xlu0 %1948
        %1950 = vrot.lane.b32.xlu0 %v1942, 96
        %v1951 = vpop.permute.xlu0 %1950
        %1952 = vrot.lane.b32.xlu0 %v1943, 96
        %v1953 = vpop.permute.xlu0 %1952
        %1954 = vrot.lane.b32.xlu0 %v1944, 96
        %v1955 = vpop.permute.xlu0 %1954
        %1956 = vrot.lane.b32.xlu0 %v1945, 96
        %v1957 = vpop.permute.xlu0 %1956
        %1958 = vrot.lane.b32.xlu0 %v1946, 96
        %v1959 = vpop.permute.xlu0 %1958
        %1960 = vrot.lane.b32.xlu0 %v1947, 96
        %v1961 = vpop.permute.xlu0 %1960
        %v1962 = vsel %vm1110, %v1949, %v1951
        %v1963 = vsel %vm1110, %v1951, %v1953
        %v1964 = vsel %vm1110, %v1953, %v1955
        %v1965 = vsel %vm1110, %v1955, %v1957
        %v1966 = vsel %vm1110, %v1957, %v1959
        %v1967 = vsel %vm1110, %v1959, %v1961
        %v1972 = vunpack.c.l.b16 %v1658
        %v1973 = vunpack.c.h.b16 %v1658
        %v1974 = vunpack.c.l.b16 %v1659
        %v1975 = vunpack.c.h.b16 %v1659
        %v1976 = vunpack.c.l.b16 %v1660
        %v1977 = vunpack.c.h.b16 %v1660
        %v1978 = vunpack.c.l.b16 %v1661
        %v1979 = vpack.c.b16 %v1972, %v1972
        %v1980 = vpack.c.b16 %v1973, %v1973
        %v1981 = vpack.c.b16 %v1974, %v1974
        %v1982 = vpack.c.b16 %v1975, %v1975
        %v1983 = vpack.c.b16 %v1976, %v1976
        %v1984 = vpack.c.b16 %v1977, %v1977
        %v1985 = vpack.c.b16 %v1978, %v1978
        %1986 = vrot.lane.b32.xlu0 %v1979, 95
        %v1987 = vpop.permute.xlu0 %1986
        %1988 = vrot.lane.b32.xlu0 %v1980, 95
        %v1989 = vpop.permute.xlu0 %1988
        %1990 = vrot.lane.b32.xlu0 %v1981, 95
        %v1991 = vpop.permute.xlu0 %1990
        %1992 = vrot.lane.b32.xlu0 %v1982, 95
        %v1993 = vpop.permute.xlu0 %1992
        %1994 = vrot.lane.b32.xlu0 %v1983, 95
        %v1995 = vpop.permute.xlu0 %1994
        %1996 = vrot.lane.b32.xlu0 %v1984, 95
        %v1997 = vpop.permute.xlu0 %1996
        %1998 = vrot.lane.b32.xlu0 %v1985, 95
        %v1999 = vpop.permute.xlu0 %1998
        %v2000 = vsel %vm1138, %v1987, %v1989
        %v2001 = vsel %vm1138, %v1989, %v1991
        %v2002 = vsel %vm1138, %v1991, %v1993
        %v2003 = vsel %vm1138, %v1993, %v1995
        %v2004 = vsel %vm1138, %v1995, %v1997
        %v2005 = vsel %vm1138, %v1997, %v1999
        %v2010 = vunpack.c.l.b16 %v1724
        %v2011 = vunpack.c.h.b16 %v1724
        %v2012 = vunpack.c.l.b16 %v1725
        %v2013 = vunpack.c.h.b16 %v1725
        %v2014 = vunpack.c.l.b16 %v1726
        %v2015 = vunpack.c.h.b16 %v1726
        %v2016 = vunpack.c.l.b16 %v1727
        %v2017 = vpack.c.b16 %v2010, %v2010
        %v2018 = vpack.c.b16 %v2011, %v2011
        %v2019 = vpack.c.b16 %v2012, %v2012
        %v2020 = vpack.c.b16 %v2013, %v2013
        %v2021 = vpack.c.b16 %v2014, %v2014
        %v2022 = vpack.c.b16 %v2015, %v2015
        %v2023 = vpack.c.b16 %v2016, %v2016
        %2024 = vrot.lane.b32.xlu0 %v2017, 94
        %v2025 = vpop.permute.xlu0 %2024
        %2026 = vrot.lane.b32.xlu0 %v2018, 94
        %v2027 = vpop.permute.xlu0 %2026
        %2028 = vrot.lane.b32.xlu0 %v2019, 94
        %v2029 = vpop.permute.xlu0 %2028
        %2030 = vrot.lane.b32.xlu0 %v2020, 94
        %v2031 = vpop.permute.xlu0 %2030
        %2032 = vrot.lane.b32.xlu0 %v2021, 94
        %v2033 = vpop.permute.xlu0 %2032
        %2034 = vrot.lane.b32.xlu0 %v2022, 94
        %v2035 = vpop.permute.xlu0 %2034
        %2036 = vrot.lane.b32.xlu0 %v2023, 94
        %v2037 = vpop.permute.xlu0 %2036
        %v2038 = vsel %vm1166, %v2025, %v2027
        %v2039 = vsel %vm1166, %v2027, %v2029
        %v2040 = vsel %vm1166, %v2029, %v2031
        %v2041 = vsel %vm1166, %v2031, %v2033
        %v2042 = vsel %vm1166, %v2033, %v2035
        %v2043 = vsel %vm1166, %v2035, %v2037
        %v2046 = vsel %vm450, %v1739, %v1778
        %v2049 = vsel %vm450, %v1740, %v1779
        %v2052 = vsel %vm450, %v1741, %v1780
        %v2055 = vsel %vm450, %v1742, %v1781
        %v2058 = vsel %vm450, %v1743, %v1782
        %v2061 = vsel %vm450, %v1744, %v1783
        %v2064 = vsel %vm450, %v1745, %v1777
        %v2067 = vsel %vm450, %v1816, %v1854
        %v2070 = vsel %vm450, %v1817, %v1855
        %v2073 = vsel %vm450, %v1818, %v1856
        %v2076 = vsel %vm450, %v1819, %v1857
        %v2079 = vsel %vm450, %v1820, %v1858
        %v2082 = vsel %vm450, %v1821, %v1859
        %v2085 = vsel %vm450, %v1815, %v1853
        %v2088 = vsel %vm450, %v1876, %v1911
        %v2091 = vsel %vm450, %v1887, %v1924
        %v2094 = vsel %vm450, %v1888, %v1925
        %v2097 = vsel %vm450, %v1889, %v1926
        %v2100 = vsel %vm450, %v1890, %v1927
        %v2103 = vsel %vm450, %v1891, %v1928
        %v2106 = vsel %vm450, %v1886, %v1929
        %v2109 = vsel %vm450, %v1949, %v1987
        %v2112 = vsel %vm450, %v1962, %v2000
        %v2115 = vsel %vm450, %v1963, %v2001
        %v2118 = vsel %vm450, %v1964, %v2002
        %v2121 = vsel %vm450, %v1965, %v2003
        %v2124 = vsel %vm450, %v1966, %v2004
        %v2127 = vsel %vm450, %v1967, %v2005
        %v2128 = vld [vmem:[%s5] sm:$0xf]
        %v2129 = vld [vmem:[%s6] sm:$0xff]
        %2131 = vset.pattern.permute.xlu0 0
        %2132 = vperm.xlu0 %2131, %v2129
        %v2133 = vpop.permute.xlu0 %2132
        %2163 = vrot.lane.b32.xlu0 %v2046, 17
        %v2164 = vpop.permute.xlu0 %2163
        %2165 = vrot.lane.b32.xlu0 %v2049, 17
        %v2166 = vpop.permute.xlu0 %2165
        %2167 = vrot.lane.b32.xlu0 %v2052, 17
        %v2168 = vpop.permute.xlu0 %2167
        %2169 = vrot.lane.b32.xlu0 %v2055, 17
        %v2170 = vpop.permute.xlu0 %2169
        %2171 = vrot.lane.b32.xlu0 %v2058, 17
        %v2172 = vpop.permute.xlu0 %2171
        %2173 = vrot.lane.b32.xlu0 %v2061, 17
        %v2174 = vpop.permute.xlu0 %2173
        %2175 = vrot.lane.b32.xlu0 %v2064, 17
        %v2176 = vpop.permute.xlu0 %2175
        %2177 = vrot.lane.b32.xlu0 %v2067, 17
        %v2178 = vpop.permute.xlu0 %2177
        %2179 = vrot.lane.b32.xlu0 %v2070, 17
        %v2180 = vpop.permute.xlu0 %2179
        %2181 = vrot.lane.b32.xlu0 %v2073, 17
        %v2182 = vpop.permute.xlu0 %2181
        %2183 = vrot.lane.b32.xlu0 %v2076, 17
        %v2184 = vpop.permute.xlu0 %2183
        %2185 = vrot.lane.b32.xlu0 %v2079, 17
        %v2186 = vpop.permute.xlu0 %2185
        %2187 = vrot.lane.b32.xlu0 %v2082, 17
        %v2188 = vpop.permute.xlu0 %2187
        %2189 = vrot.lane.b32.xlu0 %v2085, 17
        %v2190 = vpop.permute.xlu0 %2189
        %2191 = vrot.lane.b32.xlu0 %v2088, 17
        %v2192 = vpop.permute.xlu0 %2191
        %2193 = vrot.lane.b32.xlu0 %v2091, 17
        %v2194 = vpop.permute.xlu0 %2193
        %2195 = vrot.lane.b32.xlu0 %v2094, 17
        %v2196 = vpop.permute.xlu0 %2195
        %2197 = vrot.lane.b32.xlu0 %v2097, 17
        %v2198 = vpop.permute.xlu0 %2197
        %2199 = vrot.lane.b32.xlu0 %v2100, 17
        %v2200 = vpop.permute.xlu0 %2199
        %2201 = vrot.lane.b32.xlu0 %v2103, 17
        %v2202 = vpop.permute.xlu0 %2201
        %2203 = vrot.lane.b32.xlu0 %v2106, 17
        %v2204 = vpop.permute.xlu0 %2203
        %2205 = vrot.lane.b32.xlu0 %v2109, 17
        %v2206 = vpop.permute.xlu0 %2205
        %2207 = vrot.lane.b32.xlu0 %v2112, 17
        %v2208 = vpop.permute.xlu0 %2207
        %2209 = vrot.lane.b32.xlu0 %v2115, 17
        %v2210 = vpop.permute.xlu0 %2209
        %2211 = vrot.lane.b32.xlu0 %v2118, 17
        %v2212 = vpop.permute.xlu0 %2211
        %2213 = vrot.lane.b32.xlu0 %v2121, 17
        %v2214 = vpop.permute.xlu0 %2213
        %2215 = vrot.lane.b32.xlu0 %v2124, 17
        %v2216 = vpop.permute.xlu0 %2215
        %2217 = vrot.lane.b32.xlu0 %v2127, 17
        %v2218 = vpop.permute.xlu0 %2217
        %2219 = vrot.lane.b32.xlu0 %v2025, 17
        %v2220 = vpop.permute.xlu0 %2219
        %2221 = vrot.lane.b32.xlu0 %v2038, 17
        %v2222 = vpop.permute.xlu0 %2221
        %2223 = vrot.lane.b32.xlu0 %v2039, 17
        %v2224 = vpop.permute.xlu0 %2223
        %2225 = vrot.lane.b32.xlu0 %v2040, 17
        %v2226 = vpop.permute.xlu0 %2225
        %2227 = vrot.lane.b32.xlu0 %v2041, 17
        %v2228 = vpop.permute.xlu0 %2227
        %2229 = vrot.lane.b32.xlu0 %v2042, 17
        %v2230 = vpop.permute.xlu0 %2229
        %2231 = vrot.lane.b32.xlu0 %v2043, 17
        %v2232 = vpop.permute.xlu0 %2231
        %v2233 = vsel %vm941, %v2164, %v2166
        %v2234 = vsel %vm941, %v2166, %v2168
        %v2235 = vsel %vm941, %v2168, %v2170
        %v2236 = vsel %vm941, %v2170, %v2172
        %v2237 = vsel %vm941, %v2172, %v2174
        %v2238 = vsel %vm941, %v2174, %v2176
        %v2239 = vsel %vm941, %v2178, %v2180
        %v2240 = vsel %vm941, %v2180, %v2182
        %v2241 = vsel %vm941, %v2182, %v2184
        %v2242 = vsel %vm941, %v2184, %v2186
        %v2243 = vsel %vm941, %v2186, %v2188
        %v2244 = vsel %vm941, %v2188, %v2190
        %v2245 = vsel %vm941, %v2192, %v2194
        %v2246 = vsel %vm941, %v2194, %v2196
        %v2247 = vsel %vm941, %v2196, %v2198
        %v2248 = vsel %vm941, %v2198, %v2200
        %v2249 = vsel %vm941, %v2200, %v2202
        %v2250 = vsel %vm941, %v2202, %v2204
        %v2251 = vsel %vm941, %v2206, %v2208
        %v2252 = vsel %vm941, %v2208, %v2210
        %v2253 = vsel %vm941, %v2210, %v2212
        %v2254 = vsel %vm941, %v2212, %v2214
        %v2255 = vsel %vm941, %v2214, %v2216
        %v2256 = vsel %vm941, %v2216, %v2218
        %v2257 = vsel %vm941, %v2220, %v2222
        %v2258 = vsel %vm941, %v2222, %v2224
        %v2259 = vsel %vm941, %v2224, %v2226
        %v2260 = vsel %vm941, %v2226, %v2228
        %v2261 = vsel %vm941, %v2228, %v2230
        %v2262 = vsel %vm941, %v2230, %v2232
        %vm2287 = vcmask 588800
        %v2289 = vsel %vm2287, %v2128, 0
        %v2292 = vsel %vm450, %v2257, 0
        %v2295 = vsel %vm450, %v2258, 0
        %v2298 = vsel %vm450, %v2259, 0
        %v2301 = vsel %vm450, %v2260, 0
        %v2304 = vsel %vm450, %v2261, 0
        %v2307 = vsel %vm450, %v2262, 0
        %2309 = vmatprep.subr.bf16.mxu0 %v2234
        %2310 = vmatpush1.bf16.msra.mxu0 %v2233
        %2311 = vmatprep.subr.bf16.mxu0 %v2240
        %2312 = vmatpush1.bf16.msra.mxu0 %v2239
        %2313 = vmatprep.subr.bf16.mxu0 %v2246
        %2314 = vmatpush1.bf16.msra.mxu0 %v2245
        %2315 = vmatprep.subr.bf16.mxu0 %v2252
        %2316 = vmatpush1.bf16.msra.mxu0 %v2251
        %2317 = vmatprep.subr.bf16.mxu0 %v2295
        %2318 = vmatpush1.bf16.msra.mxu0 %v2292
        %2319 = vmatprep.subr.bf16.mxu0 0
        %2320 = vmatpush1.bf16.msra.mxu0 0
        %2321 = vmatprep.subr.bf16.mxu0 0
        %2322 = vmatpush1.bf16.msra.mxu0 0
        %2323 = vmatprep.subr.bf16.mxu0 0
        %2324 = vmatpush1.bf16.msra.mxu0 0
        %2325 = vmatprep.subr.bf16.mxu0 0
        %2326 = vmatpush1.bf16.msra.mxu0 0
        %2327 = vmatprep.subr.bf16.mxu0 0
        %2328 = vmatpush1.bf16.msra.mxu0 0
        %2329 = vmatprep.subr.bf16.mxu0 0
        %2330 = vmatpush1.bf16.msra.mxu0 0
        %2331 = vmatprep.subr.bf16.mxu0 0
        %2332 = vmatpush1.bf16.msra.mxu0 0
        %2333 = vmatprep.subr.bf16.mxu0 0
        %2334 = vmatpush1.bf16.msra.mxu0 0
        %2335 = vmatprep.subr.bf16.mxu0 0
        %2336 = vmatpush1.bf16.msra.mxu0 0
        %2337 = vmatprep.subr.bf16.mxu0 0
        %2338 = vmatpush1.bf16.msra.mxu0 0
        %2339 = vmatprep.subr.bf16.mxu0 0
        %2340 = vmatpush1.bf16.msra.mxu0 0
        %2341 = vmatprep.mubr.bf16.mxu0 0
        %2342 = vmatmul.mubr.bf16.gmra.mrb[0].mxu0 %v2289
        %v2343 = vpop.f32.mrb[0].mxu0
        %v2344 = vadd.f32 %v2133, %v2343
        %v2345 = vpop.f32.mrb[0].mxu0
        %v2346 = vadd.f32 %v2133, %v2345
        %v2347 = vpop.f32.mrb[0].mxu0
        %v2348 = vpop.f32.mrb[0].mxu0
        %2349 = vdwg.mxu0
        %2350 = vmatprep.subr.bf16.mxu0 %v2236
        %2351 = vmatpush1.bf16.msra.mxu0 %v2235
        %2352 = vmatprep.subr.bf16.mxu0 %v2242
        %2353 = vmatpush1.bf16.msra.mxu0 %v2241
        %2354 = vmatprep.subr.bf16.mxu0 %v2248
        %2355 = vmatpush1.bf16.msra.mxu0 %v2247
        %2356 = vmatprep.subr.bf16.mxu0 %v2254
        %2357 = vmatpush1.bf16.msra.mxu0 %v2253
        %2358 = vmatprep.subr.bf16.mxu0 %v2301
        %2359 = vmatpush1.bf16.msra.mxu0 %v2298
        %2360 = vmatprep.subr.bf16.mxu0 0
        %2361 = vmatpush1.bf16.msra.mxu0 0
        %2362 = vmatprep.subr.bf16.mxu0 0
        %2363 = vmatpush1.bf16.msra.mxu0 0
        %2364 = vmatprep.subr.bf16.mxu0 0
        %2365 = vmatpush1.bf16.msra.mxu0 0
        %2366 = vmatprep.subr.bf16.mxu0 0
        %2367 = vmatpush1.bf16.msra.mxu0 0
        %2368 = vmatprep.subr.bf16.mxu0 0
        %2369 = vmatpush1.bf16.msra.mxu0 0
        %2370 = vmatprep.subr.bf16.mxu0 0
        %2371 = vmatpush1.bf16.msra.mxu0 0
        %2372 = vmatprep.subr.bf16.mxu0 0
        %2373 = vmatpush1.bf16.msra.mxu0 0
        %2374 = vmatprep.subr.bf16.mxu0 0
        %2375 = vmatpush1.bf16.msra.mxu0 0
        %2376 = vmatprep.subr.bf16.mxu0 0
        %2377 = vmatpush1.bf16.msra.mxu0 0
        %2378 = vmatprep.subr.bf16.mxu0 0
        %2379 = vmatpush1.bf16.msra.mxu0 0
        %2380 = vmatprep.subr.bf16.mxu0 0
        %2381 = vmatpush1.bf16.msra.mxu0 0
        %2382 = vmatprep.mubr.bf16.mxu0 0
        %2383 = vmatmul.mubr.bf16.gmra.mrb[0].mxu0 %v2289
        %v2384 = vpop.f32.mrb[0].mxu0
        %v2385 = vpop.f32.mrb[0].mxu0
        %v2386 = vadd.f32 %v2133, %v2385
        %v2387 = vpop.f32.mrb[0].mxu0
        %v2388 = vpop.f32.mrb[0].mxu0
        %2389 = vdwg.mxu0
        %2390 = vmatprep.subr.bf16.mxu0 %v2238
        %2391 = vmatpush1.bf16.msra.mxu0 %v2237
        %2392 = vmatprep.subr.bf16.mxu0 %v2244
        %2393 = vmatpush1.bf16.msra.mxu0 %v2243
        %2394 = vmatprep.subr.bf16.mxu0 %v2250
        %2395 = vmatpush1.bf16.msra.mxu0 %v2249
        %2396 = vmatprep.subr.bf16.mxu0 %v2256
        %2397 = vmatpush1.bf16.msra.mxu0 %v2255
        %2398 = vmatprep.subr.bf16.mxu0 %v2307
        %2399 = vmatpush1.bf16.msra.mxu0 %v2304
        %2400 = vmatprep.subr.bf16.mxu0 0
        %2401 = vmatpush1.bf16.msra.mxu0 0
        %2402 = vmatprep.subr.bf16.mxu0 0
        %2403 = vmatpush1.bf16.msra.mxu0 0
        %2404 = vmatprep.subr.bf16.mxu0 0
        %2405 = vmatpush1.bf16.msra.mxu0 0
        %2406 = vmatprep.subr.bf16.mxu0 0
        %2407 = vmatpush1.bf16.msra.mxu0 0
        %2408 = vmatprep.subr.bf16.mxu0 0
        %2409 = vmatpush1.bf16.msra.mxu0 0
        %2410 = vmatprep.subr.bf16.mxu0 0
        %2411 = vmatpush1.bf16.msra.mxu0 0
        %2412 = vmatprep.subr.bf16.mxu0 0
        %2413 = vmatpush1.bf16.msra.mxu0 0
        %2414 = vmatprep.subr.bf16.mxu0 0
        %2415 = vmatpush1.bf16.msra.mxu0 0
        %2416 = vmatprep.subr.bf16.mxu0 0
        %2417 = vmatpush1.bf16.msra.mxu0 0
        %2418 = vmatprep.subr.bf16.mxu0 0
        %2419 = vmatpush1.bf16.msra.mxu0 0
        %2420 = vmatprep.subr.bf16.mxu0 0
        %2421 = vmatpush1.bf16.msra.mxu0 0
        %2422 = vmatprep.mubr.bf16.mxu0 0
        %2423 = vmatmul.mubr.bf16.gmra.mrb[0].mxu0 %v2289
        %v2424 = vpop.f32.mrb[0].mxu0
        %v2425 = vadd.f32 %v2133, %v2424
        %v2426 = vpop.f32.mrb[0].mxu0
        %v2427 = vpop.f32.mrb[0].mxu0
        %v2428 = vpop.f32.mrb[0].mxu0
        %2429 = vdwg.mxu0
        %vm2430 = vcmp.gt.f32.partialorder %v2344, 0.0
        %vm2431 = vcmp.gt.f32.partialorder %v2346, 0.0
        %vm2432 = vcmp.gt.f32.partialorder %v2386, 0.0
        %vm2433 = vcmp.gt.f32.partialorder %v2425, 0.0
        %v2434 = vmul.f32 %v2344, 0.01
        %v2435 = vmul.f32 %v2346, 0.01
        %v2436 = vmul.f32 %v2386, 0.01
        %v2437 = vmul.f32 %v2425, 0.01
        %v2438 = vsel %vm2430, %v2344, %v2434
        %v2439 = vsel %vm2431, %v2346, %v2435
        %v2440 = vsel %vm2432, %v2386, %v2436
        %v2441 = vsel %vm2433, %v2425, %v2437
        %2442 = vst [vmem:[%s328] sm:$0xff] %v2438
        %2443 = vst [vmem:[%s328 + $0x8] sm:$0xff] %v2439
        %s2444 = scalar_lea.vmem %s328, 16 [#allocation9]
        %2445 = vst [vmem:[%s2444] sm:$0xff] %v2440
        %2446 = vst [vmem:[%s2444 + $0x8] sm:$0xff] %v2441
        %s2447 = sand.u32 %s190, 1
        %s2448 = scalar_lea.sflag [#allocation6], %s2447
        %s2449 = sand.u32 %s190, 1
        %s2450 = smul.addr %s2449, 32
        %s2451 = scalar_lea.vmem [#allocation9], %s2450
        // Predicated region
        $region57: #{tpu_custom_call.1} parent=47 // pred_check
          %p2452 = pneg %p200
        $region58: #{tpu_custom_call.1} parent=47 // pred_check_branch
          %2454 = sbr.rel (%p2452) target = $region60
        $region59: #{tpu_custom_call.1} parent=47 // pred_region
          %s2455 = smul.u32 2, %s25
          %s2457 = ssub.s32 512, 512
          %2458 = vsyncadd %s2448, %s2457
          %s2459 = smul.addr %s2455, 2
          %s2460 = smul.addr %s2459, 128
          %s2461 = scalar_lea.hbm %s7, %s2460
          %s2462 = sshll.u32 %s2451, 4
          %s2463 = int_to_ptr.vmem [resolvable:$true] %s2462
          %2468 = dma.vmem_to_hbm [thread:$0]  %s2463, 512, %s2461, %s2448, 256, 256, 16
        $region60: #{tpu_custom_call.1} parent=47 // pred_fallthru
          _
      $region48: #{tpu_custom_call.1} parent=5 // pred_fallthru
        _
      %p2469 = scmp.le.s32.totalorder 2, %s20
      // Predicated region
      $region61: #{tpu_custom_call.1} parent=5 // pred_check
        %p2470 = pneg %p2469
      $region62: #{tpu_custom_call.1} parent=5 // pred_check_branch
        %2472 = sbr.rel (%p2470) target = $region64
      $region63: #{tpu_custom_call.1} parent=5 // pred_region
        %s2473 = ssub.s32 %s20, 2
        // Predicated region
        $region65: #{tpu_custom_call.1} parent=63 // pred_check
          %p2474 = pneg %p206
        $region66: #{tpu_custom_call.1} parent=63 // pred_check_branch
          %2476 = sbr.rel (%p2474) target = $region68
        $region67: #{tpu_custom_call.1} parent=63 // pred_region
          %s2477 = sand.u32 %s191, 1
          %s2478 = scalar_lea.sflag [#allocation6], %s2477
          %s2479 = sand.u32 %s191, 1
          %s2480 = smul.addr %s2479, 32
          %s2481 = scalar_lea.vmem [#allocation9], %s2480
          %2482 = dma.done %s2478, 512
        $region68: #{tpu_custom_call.1} parent=63 // pred_fallthru
          _
      $region64: #{tpu_custom_call.1} parent=5 // pred_fallthru
        _
    $region6: #{tpu_custom_call.1} parent=1 // loop_footer
      %s24 = sadd.s32 1, %s20
    $region7: #{tpu_custom_call.1} parent=1 // loop_footer_branch
      %19 = sbr.rel target = $region3
    $region8: #{tpu_custom_call.1} parent=1 // loop_exit
      _
    %2483 = vsyncpa [#allocation5], 1
    %s2484 = scalar_lea.sflag [#allocation5], 1
    %2485 = vsyncpa %s2484, 1
    %2486 = vsyncpa [#allocation8], 1
    %2487 = vsyncpa [#allocation6], 1
    %s2488 = scalar_lea.sflag [#allocation6], 1
    %2489 = vsyncpa %s2488, 1

</llo_original>
